<compile_context>
chip_gen: v5e
topology: v5e:2x2
jax: 0.10.0
libtpu: 0.0.40
codegen_flags: <defaults>
</compile_context>

<pallas_src>
import functools

import jax
import jax.numpy as jnp
from jax import lax
from jax.experimental import pallas as pl
from jax.experimental.pallas import tpu as pltpu

EPS = 1e-5          # nn.InstanceNorm2d default eps
NEG_SLOPE = 0.01    # LeakyReLU negative_slope (kwargs['negative_slope'])


def _lrelu(y):
    return jnp.where(y > 0, y, NEG_SLOPE * y)


def resid_block_kernel(x_ref, wa_ref, w2_ref, proj_ref, vec_ref, out_ref,
                       *, H, W, Cout):
    """One grid step: Nb batch elements, lane-dense (rows=H, lanes=W*C)."""
    Nb = out_ref.shape[0]
    L2 = W * Cout               # lane width of a single conv output
    f32 = jnp.float32
    inv_hw = 1.0 / float(H * W)

    vec = vec_ref[...]          # (8, 2*L2) packed per-lane bias/gamma/beta rows
    proj = proj_ref[...]        # (2*L2, 2*L2) f32 channel-averaging projector

    def shifted_cat(y):
        # rows of the result: [ y[h-1] | y[h] | y[h+1] ] with zeros at the H
        # boundaries (the conv's H zero padding; W padding is folded into the
        # banded weights).  Built fully in registers: no VMEM pad buffer and
        # no unaligned sublane stores/reloads.
        zrow = jnp.zeros_like(y[:, :1, :])
        up = jnp.concatenate([zrow, y[:, :-1, :]], axis=1)   # y[h-1]
        dn = jnp.concatenate([y[:, 1:, :], zrow], axis=1)    # y[h+1]
        return jnp.concatenate([up, y, dn], axis=-1)         # lanes: kh=0|1|2

    def banded_conv(y, w_ref):
        # Single wide-K matmul per stage: (Nb*H, 3*K) x (3*K, lanes).
        slab = shifted_cat(y).astype(w_ref.dtype)
        acc = jnp.dot(slab.reshape(Nb * H, slab.shape[-1]), w_ref[...],
                      preferred_element_type=f32)
        return acc.reshape(Nb, H, w_ref.shape[-1])

    def inst_norm(acc3, prj, g_row, be_row):
        # Per-(n, channel) biased stats over the H sublanes and the W lane
        # copies of each channel (= H*W spatial positions) via one f32 matmul
        # against the precomputed projector.
        mean = jnp.dot(jnp.sum(acc3, axis=1), prj,
                       preferred_element_type=f32) * inv_hw       # (Nb, L)
        cent = acc3 - mean[:, None, :]
        var = jnp.dot(jnp.sum(cent * cent, axis=1), prj,
                      preferred_element_type=f32) * inv_hw
        inv = lax.rsqrt(var + EPS)
        return cent * inv[:, None, :] * g_row[None, None, :] + be_row[None, None, :]

    # ---- stage A: conv1 + downsample conv fused along the output lanes ------
    x = x_ref[...].astype(f32)                        # (Nb, H, WCinP)
    acc_a = banded_conv(x, wa_ref) + vec[0][None, None, :]     # fused bias
    z_a = inst_norm(acc_a, proj, vec[1], vec[2])
    y1 = _lrelu(z_a[:, :, :L2])        # ConvLayer branch: conv1 -> IN -> lrelu
    res = z_a[:, :, L2:]               # downsample branch: conv -> IN (no lrelu)

    # ---- stage B: conv2(y1) -> IN, all in registers --------------------------
    acc_2 = banded_conv(y1, w2_ref) + vec[3, :L2][None, None, :]
    z_2 = inst_norm(acc_2, proj[:L2, :L2], vec[4, :L2], vec[5, :L2])

    out_ref[...] = _lrelu(z_2 + res).astype(out_ref.dtype)


def _banded_weight(w, W, row_pad=0):
    """(3, 3, Cin, Co) HWIO conv weight -> (3*(W*Cin+row_pad), W*Co) fused-kh
    banded matrix.

    Within the kh block, entry [w_in*Cin + ci, w_out*Co + co] =
    w[kh, w_in - w_out + 1, ci, co]; taps reading outside [0, W) are absent,
    so the conv's zero padding along W is folded into the weights.  `row_pad`
    zero rows match the lane padding of the input slab.
    """
    Cin, Co = w.shape[2], w.shape[3]
    blocks = []
    for kh in range(3):
        big = jnp.zeros((W * Cin, W * Co), jnp.float32)
        for kw in range(3):
            big = big + jnp.kron(jnp.eye(W, k=1 - kw, dtype=jnp.float32),
                                 w[kh, kw].astype(jnp.float32))
        if row_pad:
            big = jnp.pad(big, ((0, row_pad), (0, 0)))
        blocks.append(big)
    return jnp.concatenate(blocks, axis=0)            # (3*(W*Cin+row_pad), W*Co)


def _const_spec(shape):
    """Grid-invariant input: constant index_map, single-buffered in VMEM."""
    nd = len(shape)
    return pl.BlockSpec(shape, lambda n: (0,) * nd,
                        pipeline_mode=pl.Buffered(1))


def resid_block_pallas(x_nhwc, params, *, batch_block=1,
                       mxu_dtype=jnp.bfloat16, out_dtype=jnp.float32):
    N, H, W, Cin = x_nhwc.shape
    Cout = params["w1"].shape[-1]
    assert N % batch_block == 0, "batch must be divisible by batch_block"
    Nb = batch_block
    L2 = W * Cout
    LA = 2 * L2
    WCin = W * Cin
    WCinP = -(-WCin // 128) * 128        # pad input lanes to a 128-lane multiple

    # Lane-dense input (N, H, WCinP): rows = H sublanes, lanes = W*Cin.
    x2 = x_nhwc.reshape(N, H, WCin).astype(jnp.float32)
    if WCinP != WCin:
        x2 = jnp.pad(x2, ((0, 0), (0, 0), (0, WCinP - WCin)))

    # conv1 and the downsample conv share their input -> fuse along output lanes.
    wa_big = jnp.concatenate(
        [_banded_weight(params["w1"], W, row_pad=WCinP - WCin),
         _banded_weight(params["wd"], W, row_pad=WCinP - WCin)],
        axis=-1).astype(mxu_dtype)                         # (3*WCinP, LA)
    w2_big = _banded_weight(params["w2"], W).astype(mxu_dtype)   # (3*L2, L2)

    # Channel-averaging projector for the instance-norm stats (hoisted out of
    # the kernel; p_2 == proj[:L2,:L2]).  Kept f32 so the stats matmul does not
    # round the accumulated sums.
    li = jnp.arange(LA)
    proj = ((li[:, None] % Cout == li[None, :] % Cout)
            & (li[:, None] // L2 == li[None, :] // L2)).astype(jnp.float32)

    def tile_w(v):                       # per-channel (1, C) -> per-lane (W*C,)
        return jnp.tile(v.reshape(-1).astype(jnp.float32), W)

    def fused(a, b):
        return jnp.concatenate([tile_w(a), tile_w(b)])

    def padded(v):
        return jnp.concatenate([tile_w(v), jnp.zeros((LA - L2,), jnp.float32)])

    zeros_la = jnp.zeros((LA,), jnp.float32)
    vecs = jnp.stack([fused(params["b1"], params["bd"]),
                      fused(params["g1"], params["gd"]),
                      fused(params["be1"], params["bed"]),
                      padded(params["b2"]),
                      padded(params["g2"]),
                      padded(params["be2"]),
                      zeros_la, zeros_la])                  # (8, LA)

    kernel = functools.partial(resid_block_kernel, H=H, W=W, Cout=Cout)

    item = jnp.dtype(mxu_dtype).itemsize
    flops = 2 * N * H * W * 9 * (Cin * 2 * Cout + Cout * Cout)
    bytes_accessed = (4 * (int(x2.size) + int(proj.size) + int(vecs.size))
                      + item * (int(wa_big.size) + int(w2_big.size))
                      + jnp.dtype(out_dtype).itemsize * N * H * L2)

    out2 = pl.pallas_call(
        kernel,
        out_shape=jax.ShapeDtypeStruct((N, H, L2), out_dtype),
        grid_spec=pltpu.PrefetchScalarGridSpec(
            num_scalar_prefetch=0,
            grid=(N // Nb,),
            in_specs=[
                pl.BlockSpec((Nb, H, WCinP), lambda n: (n, 0, 0)),
                _const_spec((3 * WCinP, LA)),
                _const_spec((3 * L2, L2)),
                _const_spec((LA, LA)),
                _const_spec((8, LA)),
            ],
            out_specs=pl.BlockSpec((Nb, H, L2), lambda n: (n, 0, 0)),
        ),
        compiler_params=pltpu.CompilerParams(
            dimension_semantics=("parallel",)),
        cost_estimate=pl.CostEstimate(flops=flops,
                                      transcendentals=N * 3 * Cout,
                                      bytes_accessed=bytes_accessed),
    )(x2, wa_big, w2_big, proj, vecs)

    return out2.reshape(N, H, W, Cout)


# ---------------- pure-JAX reference for validation ----------------
def resid_block_ref(x_nhwc, params):
    def conv(x, w, b):
        y = lax.conv_general_dilated(
            x, w, window_strides=(1, 1), padding=((1, 1), (1, 1)),
            dimension_numbers=("NHWC", "HWIO", "NHWC"))
        return y + b.reshape(1, 1, 1, -1)

    def inorm(y, g, be):
        mean = y.mean(axis=(1, 2), keepdims=True)
        var = ((y - mean) ** 2).mean(axis=(1, 2), keepdims=True)
        return ((y - mean) / jnp.sqrt(var + EPS)) * g.reshape(1, 1, 1, -1) \
               + be.reshape(1, 1, 1, -1)

    y1 = _lrelu(inorm(conv(x_nhwc, params["w1"], params["b1"][0]),
                      params["g1"][0], params["be1"][0]))
    y2 = inorm(conv(y1, params["w2"], params["b2"][0]),
               params["g2"][0], params["be2"][0])
    res = inorm(conv(x_nhwc, params["wd"], params["bd"][0]),
                params["gd"][0], params["bed"][0])
    return _lrelu(y2 + res)


def make_params(key, cin, cout):
    ks = jax.random.split(key, 12)
    return {
        "w1": jax.random.normal(ks[0], (3, 3, cin, cout), jnp.float32) * 0.1,
        "b1": jax.random.normal(ks[1], (1, cout), jnp.float32) * 0.05,
        "g1": 1.0 + 0.1 * jax.random.normal(ks[2], (1, cout), jnp.float32),
        "be1": 0.05 * jax.random.normal(ks[3], (1, cout), jnp.float32),
        "w2": jax.random.normal(ks[4], (3, 3, cout, cout), jnp.float32) * 0.1,
        "b2": jax.random.normal(ks[5], (1, cout), jnp.float32) * 0.05,
        "g2": 1.0 + 0.1 * jax.random.normal(ks[6], (1, cout), jnp.float32),
        "be2": 0.05 * jax.random.normal(ks[7], (1, cout), jnp.float32),
        "wd": jax.random.normal(ks[8], (3, 3, cin, cout), jnp.float32) * 0.1,
        "bd": jax.random.normal(ks[9], (1, cout), jnp.float32) * 0.05,
        "gd": 1.0 + 0.1 * jax.random.normal(ks[10], (1, cout), jnp.float32),
        "bed": 0.05 * jax.random.normal(ks[11], (1, cout), jnp.float32),
    }


if __name__ == "__main__":
    # batch=4, W*Cout = 128 -> lane-dense output.  batch_block=2 keeps the grid
    # even (both v7x TensorCores get a step); on single-TC v5e/v6e prefer
    # batch_block=N (grid=(1,)) so M=N*H=64 better fills the MXU.
    N, Cin, Cout, H, W = 4, 4, 8, 16, 16
    key = jax.random.PRNGKey(0)
    kx, kp = jax.random.split(key)
    x = jax.random.normal(kx, (N, H, W, Cin), jnp.float32)   # NHWC
    params = make_params(kp, Cin, Cout)

    ref = jax.block_until_ready(resid_block_ref(x, params))

    # f32 MXU operands: faithful to the PyTorch module's f32 math.
    out_f32 = jax.block_until_ready(
        resid_block_pallas(x, params, batch_block=2, mxu_dtype=jnp.float32))
    assert out_f32.shape == (N, H, W, Cout)
    assert jnp.allclose(out_f32, ref, atol=2e-4, rtol=2e-4), \
        float(jnp.max(jnp.abs(out_f32 - ref)))

    # bf16 MXU operands (perf review: native MXU rate, half weight VMEM);
    # internal IN / elementwise math stays f32, so only bf16 rounding remains.
    out_bf16 = jax.block_until_ready(
        resid_block_pallas(x, params, batch_block=2, mxu_dtype=jnp.bfloat16))
    assert jnp.allclose(out_bf16, ref, atol=6e-2, rtol=6e-2), \
        float(jnp.max(jnp.abs(out_bf16 - ref)))

    print("KERNEL_OK")
</pallas_src>

<mosaic_0001>
module attributes {stable_mosaic.version = 11 : i64} {
  func.func @resid_block_kernel(%arg0: i32, %arg1: memref<2x16x128xf32, #tpu.memory_space<vmem>>, %arg2: memref<384x256xf32, #tpu.memory_space<vmem>>, %arg3: memref<384x128xf32, #tpu.memory_space<vmem>>, %arg4: memref<256x256xf32, #tpu.memory_space<vmem>>, %arg5: memref<8x256xf32, #tpu.memory_space<vmem>>, %arg6: memref<2x16x128xf32, #tpu.memory_space<vmem>>) attributes {dimension_semantics = [#tpu.dimension_semantics<parallel>], iteration_bounds = array<i64: 2>, scalar_prefetch = 0 : i64, scratch_operands = 0 : i64, tpu.core_type = #tpu.core_type<tc>, window_params = [{transform_indices = @transform_0, window_bounds = array<i64: 2, 16, 128>}, {pipeline_mode = #tpu.pipeline_mode<synchronous>, transform_indices = @transform_1, window_bounds = array<i64: 384, 256>}, {pipeline_mode = #tpu.pipeline_mode<synchronous>, transform_indices = @transform_2, window_bounds = array<i64: 384, 128>}, {pipeline_mode = #tpu.pipeline_mode<synchronous>, transform_indices = @transform_3, window_bounds = array<i64: 256, 256>}, {pipeline_mode = #tpu.pipeline_mode<synchronous>, transform_indices = @transform_4, window_bounds = array<i64: 8, 256>}, {transform_indices = @transform_5, window_bounds = array<i64: 2, 16, 128>}]} {
    %c0 = arith.constant 0 : index
    %c0_0 = arith.constant 0 : index
    %0 = vector.load %arg5[%c0, %c0_0] : memref<8x256xf32, #tpu.memory_space<vmem>>, vector<8x256xf32>
    %c0_1 = arith.constant 0 : index
    %c0_2 = arith.constant 0 : index
    %1 = vector.load %arg4[%c0_1, %c0_2] : memref<256x256xf32, #tpu.memory_space<vmem>>, vector<256x256xf32>
    %c0_3 = arith.constant 0 : index
    %c0_4 = arith.constant 0 : index
    %c0_5 = arith.constant 0 : index
    %2 = vector.load %arg1[%c0_3, %c0_4, %c0_5] : memref<2x16x128xf32, #tpu.memory_space<vmem>>, vector<2x16x128xf32>
    %cst = arith.constant 0.000000e+00 : f32
    %3 = vector.broadcast %cst : f32 to vector<2x1x128xf32>
    %4 = vector.extract_strided_slice %2 {offsets = [0, 0, 0], sizes = [2, 15, 128], strides = [1, 1, 1]} : vector<2x16x128xf32> to vector<2x15x128xf32>
    %5 = tpu.concatenate %3, %4 in 1 : vector<2x1x128xf32>, vector<2x15x128xf32> -> vector<2x16x128xf32>
    %6 = vector.extract_strided_slice %2 {offsets = [0, 1, 0], sizes = [2, 15, 128], strides = [1, 1, 1]} : vector<2x16x128xf32> to vector<2x15x128xf32>
    %7 = tpu.concatenate %6, %3 in 1 : vector<2x15x128xf32>, vector<2x1x128xf32> -> vector<2x16x128xf32>
    %8 = tpu.concatenate %5, %2, %7 in 2 : vector<2x16x128xf32>, vector<2x16x128xf32>, vector<2x16x128xf32> -> vector<2x16x384xf32>
    %9 = vector.shape_cast %8 : vector<2x16x384xf32> to vector<32x384xf32>
    %c0_6 = arith.constant 0 : index
    %c0_7 = arith.constant 0 : index
    %10 = vector.load %arg2[%c0_6, %c0_7] : memref<384x256xf32, #tpu.memory_space<vmem>>, vector<384x256xf32>
    %cst_8 = arith.constant dense<0.000000e+00> : vector<32x256xf32>
    %11 = tpu.matmul %9, %10, %cst_8 {dimension_numbers = #tpu.dot_dimension_numbers<[1], [0], [0], [1], [0, 0, 1, 1], [], []>} : vector<32x384xf32>, vector<384x256xf32>, vector<32x256xf32> -> vector<32x256xf32>
    %12 = vector.shape_cast %11 : vector<32x256xf32> to vector<2x16x256xf32>
    %13 = vector.extract_strided_slice %0 {offsets = [0, 0], sizes = [1, 256], strides = [1, 1]} : vector<8x256xf32> to vector<1x256xf32>
    %14 = vector.shape_cast %13 : vector<1x256xf32> to vector<256xf32>
    %15 = vector.shape_cast %14 : vector<256xf32> to vector<1x1x256xf32>
    %16 = vector.broadcast %15 : vector<1x1x256xf32> to vector<2x16x256xf32>
    %17 = arith.addf %12, %16 : vector<2x16x256xf32>
    %18 = vector.extract_strided_slice %0 {offsets = [1, 0], sizes = [1, 256], strides = [1, 1]} : vector<8x256xf32> to vector<1x256xf32>
    %19 = vector.shape_cast %18 : vector<1x256xf32> to vector<256xf32>
    %20 = vector.extract_strided_slice %0 {offsets = [2, 0], sizes = [1, 256], strides = [1, 1]} : vector<8x256xf32> to vector<1x256xf32>
    %21 = vector.shape_cast %20 : vector<1x256xf32> to vector<256xf32>
    %cst_9 = arith.constant dense<0.000000e+00> : vector<2x256xf32>
    %22 = vector.multi_reduction <add>, %17, %cst_9 [1] : vector<2x16x256xf32> to vector<2x256xf32>
    %cst_10 = arith.constant dense<0.000000e+00> : vector<2x256xf32>
    %23 = tpu.matmul %22, %1, %cst_10 {dimension_numbers = #tpu.dot_dimension_numbers<[1], [0], [0], [1], [0, 0, 1, 1], [], []>} : vector<2x256xf32>, vector<256x256xf32>, vector<2x256xf32> -> vector<2x256xf32>
    %cst_11 = arith.constant 3.906250e-03 : f32
    %24 = vector.broadcast %cst_11 : f32 to vector<2x256xf32>
    %25 = arith.mulf %23, %24 : vector<2x256xf32>
    %26 = vector.shape_cast %25 : vector<2x256xf32> to vector<2x1x256xf32>
    %27 = vector.broadcast %26 : vector<2x1x256xf32> to vector<2x16x256xf32>
    %28 = arith.subf %17, %27 : vector<2x16x256xf32>
    %29 = arith.mulf %28, %28 : vector<2x16x256xf32>
    %cst_12 = arith.constant dense<0.000000e+00> : vector<2x256xf32>
    %30 = vector.multi_reduction <add>, %29, %cst_12 [1] : vector<2x16x256xf32> to vector<2x256xf32>
    %cst_13 = arith.constant dense<0.000000e+00> : vector<2x256xf32>
    %31 = tpu.matmul %30, %1, %cst_13 {dimension_numbers = #tpu.dot_dimension_numbers<[1], [0], [0], [1], [0, 0, 1, 1], [], []>} : vector<2x256xf32>, vector<256x256xf32>, vector<2x256xf32> -> vector<2x256xf32>
    %cst_14 = arith.constant 3.906250e-03 : f32
    %32 = vector.broadcast %cst_14 : f32 to vector<2x256xf32>
    %33 = arith.mulf %31, %32 : vector<2x256xf32>
    %cst_15 = arith.constant 9.99999974E-6 : f32
    %34 = vector.broadcast %cst_15 : f32 to vector<2x256xf32>
    %35 = arith.addf %33, %34 : vector<2x256xf32>
    %36 = math.rsqrt %35 : vector<2x256xf32>
    %37 = vector.shape_cast %36 : vector<2x256xf32> to vector<2x1x256xf32>
    %38 = vector.broadcast %37 : vector<2x1x256xf32> to vector<2x16x256xf32>
    %39 = arith.mulf %28, %38 : vector<2x16x256xf32>
    %40 = vector.shape_cast %19 : vector<256xf32> to vector<1x1x256xf32>
    %41 = vector.broadcast %40 : vector<1x1x256xf32> to vector<2x16x256xf32>
    %42 = arith.mulf %39, %41 : vector<2x16x256xf32>
    %43 = vector.shape_cast %21 : vector<256xf32> to vector<1x1x256xf32>
    %44 = vector.broadcast %43 : vector<1x1x256xf32> to vector<2x16x256xf32>
    %45 = arith.addf %42, %44 : vector<2x16x256xf32>
    %46 = vector.extract_strided_slice %45 {offsets = [0, 0, 0], sizes = [2, 16, 128], strides = [1, 1, 1]} : vector<2x16x256xf32> to vector<2x16x128xf32>
    %cst_16 = arith.constant 0.000000e+00 : f32
    %47 = vector.broadcast %cst_16 : f32 to vector<2x16x128xf32>
    %48 = arith.cmpf ogt, %46, %47 : vector<2x16x128xf32>
    %cst_17 = arith.constant 0.00999999977 : f32
    %49 = vector.broadcast %cst_17 : f32 to vector<2x16x128xf32>
    %50 = arith.mulf %49, %46 : vector<2x16x128xf32>
    %51 = arith.select %48, %46, %50 : vector<2x16x128xi1>, vector<2x16x128xf32>
    %52 = vector.extract_strided_slice %45 {offsets = [0, 0, 128], sizes = [2, 16, 128], strides = [1, 1, 1]} : vector<2x16x256xf32> to vector<2x16x128xf32>
    %cst_18 = arith.constant 0.000000e+00 : f32
    %53 = vector.broadcast %cst_18 : f32 to vector<2x1x128xf32>
    %54 = vector.extract_strided_slice %51 {offsets = [0, 0, 0], sizes = [2, 15, 128], strides = [1, 1, 1]} : vector<2x16x128xf32> to vector<2x15x128xf32>
    %55 = tpu.concatenate %53, %54 in 1 : vector<2x1x128xf32>, vector<2x15x128xf32> -> vector<2x16x128xf32>
    %56 = vector.extract_strided_slice %51 {offsets = [0, 1, 0], sizes = [2, 15, 128], strides = [1, 1, 1]} : vector<2x16x128xf32> to vector<2x15x128xf32>
    %57 = tpu.concatenate %56, %53 in 1 : vector<2x15x128xf32>, vector<2x1x128xf32> -> vector<2x16x128xf32>
    %58 = tpu.concatenate %55, %51, %57 in 2 : vector<2x16x128xf32>, vector<2x16x128xf32>, vector<2x16x128xf32> -> vector<2x16x384xf32>
    %59 = vector.shape_cast %58 : vector<2x16x384xf32> to vector<32x384xf32>
    %c0_19 = arith.constant 0 : index
    %c0_20 = arith.constant 0 : index
    %60 = vector.load %arg3[%c0_19, %c0_20] : memref<384x128xf32, #tpu.memory_space<vmem>>, vector<384x128xf32>
    %cst_21 = arith.constant dense<0.000000e+00> : vector<32x128xf32>
    %61 = tpu.matmul %59, %60, %cst_21 {dimension_numbers = #tpu.dot_dimension_numbers<[1], [0], [0], [1], [0, 0, 1, 1], [], []>} : vector<32x384xf32>, vector<384x128xf32>, vector<32x128xf32> -> vector<32x128xf32>
    %62 = vector.shape_cast %61 : vector<32x128xf32> to vector<2x16x128xf32>
    %63 = vector.extract_strided_slice %0 {offsets = [3, 0], sizes = [1, 128], strides = [1, 1]} : vector<8x256xf32> to vector<1x128xf32>
    %64 = vector.shape_cast %63 : vector<1x128xf32> to vector<128xf32>
    %65 = vector.shape_cast %64 : vector<128xf32> to vector<1x1x128xf32>
    %66 = vector.broadcast %65 : vector<1x1x128xf32> to vector<2x16x128xf32>
    %67 = arith.addf %62, %66 : vector<2x16x128xf32>
    %68 = vector.extract_strided_slice %1 {offsets = [0, 0], sizes = [128, 128], strides = [1, 1]} : vector<256x256xf32> to vector<128x128xf32>
    %69 = vector.extract_strided_slice %0 {offsets = [4, 0], sizes = [1, 128], strides = [1, 1]} : vector<8x256xf32> to vector<1x128xf32>
    %70 = vector.shape_cast %69 : vector<1x128xf32> to vector<128xf32>
    %71 = vector.extract_strided_slice %0 {offsets = [5, 0], sizes = [1, 128], strides = [1, 1]} : vector<8x256xf32> to vector<1x128xf32>
    %72 = vector.shape_cast %71 : vector<1x128xf32> to vector<128xf32>
    %cst_22 = arith.constant dense<0.000000e+00> : vector<2x128xf32>
    %73 = vector.multi_reduction <add>, %67, %cst_22 [1] : vector<2x16x128xf32> to vector<2x128xf32>
    %cst_23 = arith.constant dense<0.000000e+00> : vector<2x128xf32>
    %74 = tpu.matmul %73, %68, %cst_23 {dimension_numbers = #tpu.dot_dimension_numbers<[1], [0], [0], [1], [0, 0, 1, 1], [], []>} : vector<2x128xf32>, vector<128x128xf32>, vector<2x128xf32> -> vector<2x128xf32>
    %cst_24 = arith.constant 3.906250e-03 : f32
    %75 = vector.broadcast %cst_24 : f32 to vector<2x128xf32>
    %76 = arith.mulf %74, %75 : vector<2x128xf32>
    %77 = vector.shape_cast %76 : vector<2x128xf32> to vector<2x1x128xf32>
    %78 = vector.broadcast %77 : vector<2x1x128xf32> to vector<2x16x128xf32>
    %79 = arith.subf %67, %78 : vector<2x16x128xf32>
    %80 = arith.mulf %79, %79 : vector<2x16x128xf32>
    %cst_25 = arith.constant dense<0.000000e+00> : vector<2x128xf32>
    %81 = vector.multi_reduction <add>, %80, %cst_25 [1] : vector<2x16x128xf32> to vector<2x128xf32>
    %cst_26 = arith.constant dense<0.000000e+00> : vector<2x128xf32>
    %82 = tpu.matmul %81, %68, %cst_26 {dimension_numbers = #tpu.dot_dimension_numbers<[1], [0], [0], [1], [0, 0, 1, 1], [], []>} : vector<2x128xf32>, vector<128x128xf32>, vector<2x128xf32> -> vector<2x128xf32>
    %cst_27 = arith.constant 3.906250e-03 : f32
    %83 = vector.broadcast %cst_27 : f32 to vector<2x128xf32>
    %84 = arith.mulf %82, %83 : vector<2x128xf32>
    %cst_28 = arith.constant 9.99999974E-6 : f32
    %85 = vector.broadcast %cst_28 : f32 to vector<2x128xf32>
    %86 = arith.addf %84, %85 : vector<2x128xf32>
    %87 = math.rsqrt %86 : vector<2x128xf32>
    %88 = vector.shape_cast %87 : vector<2x128xf32> to vector<2x1x128xf32>
    %89 = vector.broadcast %88 : vector<2x1x128xf32> to vector<2x16x128xf32>
    %90 = arith.mulf %79, %89 : vector<2x16x128xf32>
    %91 = vector.shape_cast %70 : vector<128xf32> to vector<1x1x128xf32>
    %92 = vector.broadcast %91 : vector<1x1x128xf32> to vector<2x16x128xf32>
    %93 = arith.mulf %90, %92 : vector<2x16x128xf32>
    %94 = vector.shape_cast %72 : vector<128xf32> to vector<1x1x128xf32>
    %95 = vector.broadcast %94 : vector<1x1x128xf32> to vector<2x16x128xf32>
    %96 = arith.addf %93, %95 : vector<2x16x128xf32>
    %97 = arith.addf %96, %52 : vector<2x16x128xf32>
    %cst_29 = arith.constant 0.000000e+00 : f32
    %98 = vector.broadcast %cst_29 : f32 to vector<2x16x128xf32>
    %99 = arith.cmpf ogt, %97, %98 : vector<2x16x128xf32>
    %cst_30 = arith.constant 0.00999999977 : f32
    %100 = vector.broadcast %cst_30 : f32 to vector<2x16x128xf32>
    %101 = arith.mulf %100, %97 : vector<2x16x128xf32>
    %102 = arith.select %99, %97, %101 : vector<2x16x128xi1>, vector<2x16x128xf32>
    %c0_31 = arith.constant 0 : index
    %c0_32 = arith.constant 0 : index
    %c0_33 = arith.constant 0 : index
    %103 = vector.load %arg6[%c0_31, %c0_32, %c0_33] : memref<2x16x128xf32, #tpu.memory_space<vmem>>, vector<2x16x128xf32>
    tpu.vector_store %arg6[%c0_31, %c0_32, %c0_33], %102 {strides = array<i32>} : memref<2x16x128xf32, #tpu.memory_space<vmem>>, vector<2x16x128xf32>,
    return
  }
  func.func @transform_0(%arg0: i32) -> (i32, i32, i32) {
    %c0_i32 = arith.constant 0 : i32
    %c0_i32_0 = arith.constant 0 : i32
    %c0_i32_1 = arith.constant 0 : i32
    return %arg0, %c0_i32, %c0_i32_0 : i32, i32, i32
  }
  func.func @transform_1(%arg0: i32) -> (i32, i32) {
    %c0_i32 = arith.constant 0 : i32
    %c0_i32_0 = arith.constant 0 : i32
    %c0_i32_1 = arith.constant 0 : i32
    return %c0_i32, %c0_i32_0 : i32, i32
  }
  func.func @transform_2(%arg0: i32) -> (i32, i32) {
    %c0_i32 = arith.constant 0 : i32
    %c0_i32_0 = arith.constant 0 : i32
    %c0_i32_1 = arith.constant 0 : i32
    return %c0_i32, %c0_i32_0 : i32, i32
  }
  func.func @transform_3(%arg0: i32) -> (i32, i32) {
    %c0_i32 = arith.constant 0 : i32
    %c0_i32_0 = arith.constant 0 : i32
    %c0_i32_1 = arith.constant 0 : i32
    return %c0_i32, %c0_i32_0 : i32, i32
  }
  func.func @transform_4(%arg0: i32) -> (i32, i32) {
    %c0_i32 = arith.constant 0 : i32
    %c0_i32_0 = arith.constant 0 : i32
    %c0_i32_1 = arith.constant 0 : i32
    return %c0_i32, %c0_i32_0 : i32, i32
  }
  func.func @transform_5(%arg0: i32) -> (i32, i32, i32) {
    %c0_i32 = arith.constant 0 : i32
    %c0_i32_0 = arith.constant 0 : i32
    %c0_i32_1 = arith.constant 0 : i32
    return %arg0, %c0_i32, %c0_i32_0 : i32, i32, i32
  }
}

</mosaic_0001>

<llo_original>
// kernel: tpu_custom_call.1
$region0: #{tpu_custom_call.1}
  #allocation0 [shape = 'u32[]', space=smem, size = 0x4, offset = 0x4, fixed_abs, tag = 'smem constant byte address 0x4 - core index']
  #allocation1 [shape = 'u32[72,128]{1,0:T(1,128)}', space=vmem, size = 0x9000, scoped, tag = 'internal scratch']
  %s0 = inlined_call_operand.hbm [shape: f32[4,16,128], index: 0, kind: input, shape index: {}]
  %s1 = inlined_call_operand.hbm [shape: f32[384,256], index: 1, kind: input, shape index: {}]
  %s2 = inlined_call_operand.hbm [shape: f32[384,128], index: 2, kind: input, shape index: {}]
  %s3 = inlined_call_operand.hbm [shape: f32[256,256], index: 3, kind: input, shape index: {}]
  %s4 = inlined_call_operand.hbm [shape: f32[8,256], index: 4, kind: input, shape index: {}]
  %s5 = inlined_call_operand.hbm [shape: f32[4,16,128], index: 5, kind: output, shape index: {}]
  %s6 = sld [smem:[#allocation0]]
  $region73: #{tpu_custom_call.1} parent=0
    _
  %s8 = ssub.s32 1, %s6
  %s9 = scalar_select 0, %s8, %s6
  $region1: #{tpu_custom_call.1} parent=0
    #allocation2 [shape = 'u8[32768]{0}', space=vmem, size = 0x8000, scoped, tag = 'input window, operand 0']
    #allocation3 [shape = 's32[2]{0}', space=sflag, size = 0x8, scoped, tag = 'scoped memory for tpu_custom_call.1']
    #allocation4 [shape = 's32[2]{0}', space=sflag, size = 0x8, scoped, tag = 'scoped memory for tpu_custom_call.1']
    #allocation5 [shape = 'u8[393216]{0}', space=vmem, size = 0x60000, scoped, tag = 'input window, operand 1, single buffered']
    #allocation6 [shape = 's32[1]{0}', space=sflag, size = 0x4, scoped, tag = 'scoped memory for tpu_custom_call.1']
    #allocation7 [shape = 'u8[196608]{0}', space=vmem, size = 0x30000, scoped, tag = 'input window, operand 2, single buffered']
    #allocation8 [shape = 'u8[262144]{0}', space=vmem, size = 0x40000, scoped, tag = 'input window, operand 3, single buffered']
    #allocation9 [shape = 's32[1]{0}', space=sflag, size = 0x4, scoped, tag = 'scoped memory for tpu_custom_call.1']
    #allocation10 [shape = 'u8[8192]{0}', space=vmem, size = 0x2000, scoped, tag = 'input window, operand 4, single buffered']
    #allocation11 [shape = 'u8[32768]{0}', space=vmem, size = 0x8000, scoped, tag = 'output window, operand 0']
    %10 = vsyncpa [#allocation3], 0
    %s11 = scalar_lea.sflag [#allocation3], 1
    %12 = vsyncpa %s11, 0
    %13 = vsyncpa [#allocation6], 0
    %14 = vsyncpa [#allocation9], 0
    %15 = vsyncpa [#allocation4], 0
    %s16 = scalar_lea.sflag [#allocation4], 1
    %17 = vsyncpa %s16, 0
    loop: start=0, step=1, limit=4
    $region2: #{tpu_custom_call.1} parent=1 // loop_pre_header
      _
    $region3: #{tpu_custom_call.1} parent=1 // loop_header
      %s19 = sphi 0, %s23
      %p20 = scmp.ge.s32.totalorder %s19, 4
      %s29 = sphi 0, %s31
      %s32 = sphi 0, %s29
      %s33 = sphi 0, %s32
      %s49 = sphi 0, %s33
      %s53 = sphi 0, %s53
      %s55 = sphi 0, %s53
      %s56 = sphi 0, %s55
      %s70 = sphi 0, %s56
      %s74 = sphi 0, %s74
      %s76 = sphi 0, %s74
      %s77 = sphi 0, %s76
      %s91 = sphi 0, %s77
      %s95 = sphi 0, %s95
      %s97 = sphi 0, %s95
      %s98 = sphi 0, %s97
      %s112 = sphi 0, %s98
      %s116 = sphi 0, %s116
      %s118 = sphi 0, %s116
      %s119 = sphi 0, %s118
      %s133 = sphi 0, %s119
      %s139 = sphi 0, %s141
      %s142 = sphi 0, %s139
      %s143 = sphi 0, %s142
      %s159 = sphi 0, %s143
    $region4: #{tpu_custom_call.1} parent=1 // loop_header_branch
      %22 = sbr.rel (%p20) target = $region8
    $region5: #{tpu_custom_call.1} parent=1 // loop_body
      %s24 = ssub.s32 %s19, 1
      %s25 = ssub.s32 %s19, 2
      %s26 = sadd.s32 %s19, 1
      %s27 = ssub.s32 %s19, %s26
      %p28 = scmp.eq.s32.totalorder %s27, 0
      %s30 = sadd.s32 %s29, 1
      %s31 = scalar_select %p28, %s29, %s30
      %p34 = pneg %p28
      %p35 = scmp.eq.s32.totalorder %s19, 1
      %p36 = por %p34, %p35
      %p37 = scmp.ne.s32.totalorder %s29, %s32
      %p38 = scmp.eq.s32.totalorder %s19, 0
      %p39 = por %p37, %p38
      %p40 = scmp.ne.s32.totalorder %s29, %s32
      %p41 = scmp.eq.s32.totalorder %s24, 1
      %p42 = por %p40, %p41
      %p43 = scmp.ne.s32.totalorder %s32, %s33
      %p44 = scmp.eq.s32.totalorder %s24, 0
      %p45 = por %p43, %p44
      %p46 = scmp.ne.s32.totalorder %s32, %s33
      %p47 = scmp.eq.s32.totalorder %s25, 1
      %p48 = por %p46, %p47
      %p50 = scmp.ne.s32.totalorder %s33, %s49
      %p51 = scmp.eq.s32.totalorder %s25, 0
      %p52 = por %p50, %p51
      %s54 = sadd.s32 %s53, 1
      %p57 = scmp.eq.s32.totalorder %s19, 1
      %p58 = scmp.ne.s32.totalorder %s53, %s55
      %p59 = scmp.eq.s32.totalorder %s19, 0
      %p60 = por %p58, %p59
      %p61 = scmp.ne.s32.totalorder %s53, %s55
      %p62 = scmp.eq.s32.totalorder %s24, 1
      %p63 = por %p61, %p62
      %p64 = scmp.ne.s32.totalorder %s55, %s56
      %p65 = scmp.eq.s32.totalorder %s24, 0
      %p66 = por %p64, %p65
      %p67 = scmp.ne.s32.totalorder %s55, %s56
      %p68 = scmp.eq.s32.totalorder %s25, 1
      %p69 = por %p67, %p68
      %p71 = scmp.ne.s32.totalorder %s56, %s70
      %p72 = scmp.eq.s32.totalorder %s25, 0
      %p73 = por %p71, %p72
      %s75 = sadd.s32 %s74, 1
      %p78 = scmp.eq.s32.totalorder %s19, 1
      %p79 = scmp.ne.s32.totalorder %s74, %s76
      %p80 = scmp.eq.s32.totalorder %s19, 0
      %p81 = por %p79, %p80
      %p82 = scmp.ne.s32.totalorder %s74, %s76
      %p83 = scmp.eq.s32.totalorder %s24, 1
      %p84 = por %p82, %p83
      %p85 = scmp.ne.s32.totalorder %s76, %s77
      %p86 = scmp.eq.s32.totalorder %s24, 0
      %p87 = por %p85, %p86
      %p88 = scmp.ne.s32.totalorder %s76, %s77
      %p89 = scmp.eq.s32.totalorder %s25, 1
      %p90 = por %p88, %p89
      %p92 = scmp.ne.s32.totalorder %s77, %s91
      %p93 = scmp.eq.s32.totalorder %s25, 0
      %p94 = por %p92, %p93
      %s96 = sadd.s32 %s95, 1
      %p99 = scmp.eq.s32.totalorder %s19, 1
      %p100 = scmp.ne.s32.totalorder %s95, %s97
      %p101 = scmp.eq.s32.totalorder %s19, 0
      %p102 = por %p100, %p101
      %p103 = scmp.ne.s32.totalorder %s95, %s97
      %p104 = scmp.eq.s32.totalorder %s24, 1
      %p105 = por %p103, %p104
      %p106 = scmp.ne.s32.totalorder %s97, %s98
      %p107 = scmp.eq.s32.totalorder %s24, 0
      %p108 = por %p106, %p107
      %p109 = scmp.ne.s32.totalorder %s97, %s98
      %p110 = scmp.eq.s32.totalorder %s25, 1
      %p111 = por %p109, %p110
      %p113 = scmp.ne.s32.totalorder %s98, %s112
      %p114 = scmp.eq.s32.totalorder %s25, 0
      %p115 = por %p113, %p114
      %s117 = sadd.s32 %s116, 1
      %p120 = scmp.eq.s32.totalorder %s19, 1
      %p121 = scmp.ne.s32.totalorder %s116, %s118
      %p122 = scmp.eq.s32.totalorder %s19, 0
      %p123 = por %p121, %p122
      %p124 = scmp.ne.s32.totalorder %s116, %s118
      %p125 = scmp.eq.s32.totalorder %s24, 1
      %p126 = por %p124, %p125
      %p127 = scmp.ne.s32.totalorder %s118, %s119
      %p128 = scmp.eq.s32.totalorder %s24, 0
      %p129 = por %p127, %p128
      %p130 = scmp.ne.s32.totalorder %s118, %s119
      %p131 = scmp.eq.s32.totalorder %s25, 1
      %p132 = por %p130, %p131
      %p134 = scmp.ne.s32.totalorder %s119, %s133
      %p135 = scmp.eq.s32.totalorder %s25, 0
      %p136 = por %p134, %p135
      %s137 = ssub.s32 %s19, %s26
      %p138 = scmp.eq.s32.totalorder %s137, 0
      %s140 = sadd.s32 %s139, 1
      %s141 = scalar_select %p138, %s139, %s140
      %p144 = pneg %p138
      %p145 = scmp.eq.s32.totalorder %s19, 1
      %p146 = por %p144, %p145
      %p147 = scmp.ne.s32.totalorder %s139, %s142
      %p148 = scmp.eq.s32.totalorder %s19, 0
      %p149 = por %p147, %p148
      %p150 = scmp.ne.s32.totalorder %s139, %s142
      %p151 = scmp.eq.s32.totalorder %s24, 1
      %p152 = por %p150, %p151
      %p153 = scmp.ne.s32.totalorder %s142, %s143
      %p154 = scmp.eq.s32.totalorder %s24, 0
      %p155 = por %p153, %p154
      %p156 = scmp.ne.s32.totalorder %s142, %s143
      %p157 = scmp.eq.s32.totalorder %s25, 1
      %p158 = por %p156, %p157
      %p160 = scmp.ne.s32.totalorder %s143, %s159
      %p161 = scmp.eq.s32.totalorder %s25, 0
      %p162 = por %p160, %p161
      %p163 = scmp.le.s32.totalorder 1, %s19
      %p164 = scmp.lt.s32.totalorder %s19, 3
      %p165 = pnand %p163, %p164
      %p166 = pneg %p165
      // Predicated region
      $region9: #{tpu_custom_call.1} parent=5 // pred_check
        _
      $region10: #{tpu_custom_call.1} parent=5 // pred_check_branch
        %168 = sbr.rel (%p165) target = $region12
      $region11: #{tpu_custom_call.1} parent=5 // pred_region
        %s169 = ssub.s32 %s19, 1
        // Predicated region
        $region13: #{tpu_custom_call.1} parent=11 // pred_check
          %p170 = pneg %p66
        $region14: #{tpu_custom_call.1} parent=11 // pred_check_branch
          %172 = sbr.rel (%p170) target = $region16
        $region15: #{tpu_custom_call.1} parent=11 // pred_region
          %174 = vsyncadd [#allocation6], 0
          %s175 = sshll.u32 %s1, 4
          %s176 = int_to_ptr.hbm [resolvable:$true] %s175
          %s177 = sshll.u32 [#allocation5], 4
          %s178 = int_to_ptr.vmem [resolvable:$true] %s177
          %183 = dma.hbm_to_vmem [thread:$0]  %s176, 12288, %s178, [#allocation6], 256, 256, 16
        $region16: #{tpu_custom_call.1} parent=11 // pred_fallthru
          _
        // Predicated region
        $region17: #{tpu_custom_call.1} parent=11 // pred_check
          %p184 = pneg %p87
        $region18: #{tpu_custom_call.1} parent=11 // pred_check_branch
          %186 = sbr.rel (%p184) target = $region20
        $region19: #{tpu_custom_call.1} parent=11 // pred_region
          %188 = vsyncadd [#allocation6], 0
          %s189 = sshll.u32 %s2, 4
          %s190 = int_to_ptr.hbm [resolvable:$true] %s189
          %s191 = sshll.u32 [#allocation7], 4
          %s192 = int_to_ptr.vmem [resolvable:$true] %s191
          %197 = dma.hbm_to_vmem [thread:$0]  %s190, 6144, %s192, [#allocation6], 128, 128, 8
        $region20: #{tpu_custom_call.1} parent=11 // pred_fallthru
          _
        // Predicated region
        $region21: #{tpu_custom_call.1} parent=11 // pred_check
          %p198 = pneg %p108
        $region22: #{tpu_custom_call.1} parent=11 // pred_check_branch
          %200 = sbr.rel (%p198) target = $region24
        $region23: #{tpu_custom_call.1} parent=11 // pred_region
          %202 = vsyncadd [#allocation9], 0
          %s203 = sshll.u32 %s3, 4
          %s204 = int_to_ptr.hbm [resolvable:$true] %s203
          %s205 = sshll.u32 [#allocation8], 4
          %s206 = int_to_ptr.vmem [resolvable:$true] %s205
          %211 = dma.hbm_to_vmem [thread:$0]  %s204, 8192, %s206, [#allocation9], 256, 256, 16
        $region24: #{tpu_custom_call.1} parent=11 // pred_fallthru
          _
        // Predicated region
        $region25: #{tpu_custom_call.1} parent=11 // pred_check
          %p212 = pneg %p129
        $region26: #{tpu_custom_call.1} parent=11 // pred_check_branch
          %214 = sbr.rel (%p212) target = $region28
        $region27: #{tpu_custom_call.1} parent=11 // pred_region
          %216 = vsyncadd [#allocation9], 0
          %s218 = sshll.u32 %s4, 4
          %s219 = int_to_ptr.hbm [resolvable:$true] %s218
          %s220 = sshll.u32 [#allocation10], 4
          %s221 = int_to_ptr.vmem [resolvable:$true] %s220
          %223 = dma.hbm_to_vmem [thread:$0]  %s219, 256, %s221, [#allocation9]
        $region28: #{tpu_custom_call.1} parent=11 // pred_fallthru
          _
      $region12: #{tpu_custom_call.1} parent=5 // pred_fallthru
        _
      %p224 = scmp.lt.s32.totalorder %s19, 2
      // Predicated region
      $region29: #{tpu_custom_call.1} parent=5 // pred_check
        %p225 = pneg %p224
      $region30: #{tpu_custom_call.1} parent=5 // pred_check_branch
        %227 = sbr.rel (%p225) target = $region32
      $region31: #{tpu_custom_call.1} parent=5 // pred_region
        // Predicated region
        $region33: #{tpu_custom_call.1} parent=31 // pred_check
          %p228 = pneg %p39
        $region34: #{tpu_custom_call.1} parent=31 // pred_check_branch
          %230 = sbr.rel (%p228) target = $region36
        $region35: #{tpu_custom_call.1} parent=31 // pred_region
          %s231 = sand.u32 %s29, 1
          %s232 = scalar_lea.sflag [#allocation3], %s231
          %s233 = sand.u32 %s29, 1
          %s234 = smul.addr %s233, 32
          %s235 = scalar_lea.vmem [#allocation2], %s234
          %s236 = smul.u32 2, %s19
          %238 = vsyncadd %s232, 0
          %s239 = smul.addr %s236, 2
          %s240 = smul.addr %s239, 8
          %s241 = scalar_lea.hbm %s0, %s240
          %s242 = sshll.u32 %s241, 4
          %s243 = int_to_ptr.hbm [resolvable:$true] %s242
          %s244 = sshll.u32 %s235, 4
          %s245 = int_to_ptr.vmem [resolvable:$true] %s244
          %250 = dma.hbm_to_vmem [thread:$0]  %s243, 512, %s245, %s232, 128, 128, 8
        $region36: #{tpu_custom_call.1} parent=31 // pred_fallthru
          _
      $region32: #{tpu_custom_call.1} parent=5 // pred_fallthru
        _
      %p251 = scmp.le.s32.totalorder 1, %s19
      %p252 = scmp.lt.s32.totalorder %s19, 3
      %p253 = pnand %p251, %p252
      %p254 = pneg %p253
      // Predicated region
      $region37: #{tpu_custom_call.1} parent=5 // pred_check
        _
      $region38: #{tpu_custom_call.1} parent=5 // pred_check_branch
        %256 = sbr.rel (%p253) target = $region40
      $region39: #{tpu_custom_call.1} parent=5 // pred_region
        %s257 = ssub.s32 %s19, 1
        %s258 = sand.u32 %s32, 1
        %s259 = scalar_lea.sflag [#allocation3], %s258
        %s260 = sand.u32 %s32, 1
        %s261 = smul.addr %s260, 32
        %s262 = scalar_lea.vmem [#allocation2], %s261
        // Predicated region
        $region41: #{tpu_custom_call.1} parent=39 // pred_check
          %p263 = pneg %p45
        $region42: #{tpu_custom_call.1} parent=39 // pred_check_branch
          %265 = sbr.rel (%p263) target = $region44
        $region43: #{tpu_custom_call.1} parent=39 // pred_region
          %267 = dma.done %s259, 512
        $region44: #{tpu_custom_call.1} parent=39 // pred_fallthru
          _
        // Predicated region
        $region45: #{tpu_custom_call.1} parent=39 // pred_check
          %p268 = pneg %p66
        $region46: #{tpu_custom_call.1} parent=39 // pred_check_branch
          %270 = sbr.rel (%p268) target = $region48
        $region47: #{tpu_custom_call.1} parent=39 // pred_region
          %272 = dma.done [#allocation6], 12288
        $region48: #{tpu_custom_call.1} parent=39 // pred_fallthru
          _
        // Predicated region
        $region49: #{tpu_custom_call.1} parent=39 // pred_check
          %p273 = pneg %p87
        $region50: #{tpu_custom_call.1} parent=39 // pred_check_branch
          %275 = sbr.rel (%p273) target = $region52
        $region51: #{tpu_custom_call.1} parent=39 // pred_region
          %277 = dma.done [#allocation6], 6144
        $region52: #{tpu_custom_call.1} parent=39 // pred_fallthru
          _
        // Predicated region
        $region53: #{tpu_custom_call.1} parent=39 // pred_check
          %p278 = pneg %p108
        $region54: #{tpu_custom_call.1} parent=39 // pred_check_branch
          %280 = sbr.rel (%p278) target = $region56
        $region55: #{tpu_custom_call.1} parent=39 // pred_region
          %282 = dma.done [#allocation9], 8192
        $region56: #{tpu_custom_call.1} parent=39 // pred_fallthru
          _
        // Predicated region
        $region57: #{tpu_custom_call.1} parent=39 // pred_check
          %p283 = pneg %p129
        $region58: #{tpu_custom_call.1} parent=39 // pred_check_branch
          %285 = sbr.rel (%p283) target = $region60
        $region59: #{tpu_custom_call.1} parent=39 // pred_region
          %287 = dma.done [#allocation9], 256
        $region60: #{tpu_custom_call.1} parent=39 // pred_fallthru
          _
        %s288 = sand.u32 %s32, 1
        %s289 = scalar_lea.sflag [#allocation3], %s288
        %s290 = sand.u32 %s32, 1
        %s291 = smul.addr %s290, 32
        %s292 = scalar_lea.vmem [#allocation2], %s291
        %p293 = pneg %p45
        %p294 = pneg %p42
        %p295 = pneg %p66
        %p296 = pneg %p63
        %p297 = pneg %p87
        %p298 = pneg %p84
        %p299 = pneg %p108
        %p300 = pneg %p105
        %p301 = pneg %p129
        %p302 = pneg %p126
        %p303 = pneg %p155
        %p304 = pneg %p152
        %s305 = sand.u32 %s142, 1
        %s306 = scalar_lea.sflag [#allocation4], %s305
        %s307 = sand.u32 %s142, 1
        %s308 = smul.addr %s307, 32
        %s309 = scalar_lea.vmem [#allocation11], %s308
        %s310 = smul.u32 2, %s24
        %s311 = smul.u32 2, %s24
        %v312 = vld [vmem:[#allocation10] sm:$0xff]
        %v313 = vld [vmem:[#allocation10 + $0x8] sm:$0xff]
        %v314 = vld [vmem:[#allocation8] sm:$0xff]
        %v315 = vld [vmem:[#allocation8 + $0x8] sm:$0xff]
        %v316 = vld [vmem:[#allocation8 + $0x10] sm:$0xff]
        %v317 = vld [vmem:[#allocation8 + $0x18] sm:$0xff]
        %v318 = vld [vmem:[#allocation8 + $0x20] sm:$0xff]
        %v319 = vld [vmem:[#allocation8 + $0x28] sm:$0xff]
        %v320 = vld [vmem:[#allocation8 + $0x30] sm:$0xff]
        %v321 = vld [vmem:[#allocation8 + $0x38] sm:$0xff]
        %v322 = vld [vmem:[#allocation8 + $0x40] sm:$0xff]
        %v323 = vld [vmem:[#allocation8 + $0x48] sm:$0xff]
        %v324 = vld [vmem:[#allocation8 + $0x50] sm:$0xff]
        %v325 = vld [vmem:[#allocation8 + $0x58] sm:$0xff]
        %v326 = vld [vmem:[#allocation8 + $0x60] sm:$0xff]
        %v327 = vld [vmem:[#allocation8 + $0x68] sm:$0xff]
        %v328 = vld [vmem:[#allocation8 + $0x70] sm:$0xff]
        %v329 = vld [vmem:[#allocation8 + $0x78] sm:$0xff]
        %v330 = vld [vmem:[#allocation8 + $0x80] sm:$0xff]
        %v331 = vld [vmem:[#allocation8 + $0x88] sm:$0xff]
        %v332 = vld [vmem:[#allocation8 + $0x90] sm:$0xff]
        %v333 = vld [vmem:[#allocation8 + $0x98] sm:$0xff]
        %v334 = vld [vmem:[#allocation8 + $0xa0] sm:$0xff]
        %v335 = vld [vmem:[#allocation8 + $0xa8] sm:$0xff]
        %v336 = vld [vmem:[#allocation8 + $0xb0] sm:$0xff]
        %v337 = vld [vmem:[#allocation8 + $0xb8] sm:$0xff]
        %v338 = vld [vmem:[#allocation8 + $0xc0] sm:$0xff]
        %v339 = vld [vmem:[#allocation8 + $0xc8] sm:$0xff]
        %v340 = vld [vmem:[#allocation8 + $0xd0] sm:$0xff]
        %v341 = vld [vmem:[#allocation8 + $0xd8] sm:$0xff]
        %v342 = vld [vmem:[#allocation8 + $0xe0] sm:$0xff]
        %v343 = vld [vmem:[#allocation8 + $0xe8] sm:$0xff]
        %v344 = vld [vmem:[#allocation8 + $0xf0] sm:$0xff]
        %v345 = vld [vmem:[#allocation8 + $0xf8] sm:$0xff]
        %v346 = vld [vmem:[#allocation8 + $0x100] sm:$0xff]
        %v347 = vld [vmem:[#allocation8 + $0x108] sm:$0xff]
        %v348 = vld [vmem:[#allocation8 + $0x110] sm:$0xff]
        %v349 = vld [vmem:[#allocation8 + $0x118] sm:$0xff]
        %v350 = vld [vmem:[#allocation8 + $0x120] sm:$0xff]
        %v351 = vld [vmem:[#allocation8 + $0x128] sm:$0xff]
        %v352 = vld [vmem:[#allocation8 + $0x130] sm:$0xff]
        %v353 = vld [vmem:[#allocation8 + $0x138] sm:$0xff]
        %v354 = vld [vmem:[#allocation8 + $0x140] sm:$0xff]
        %v355 = vld [vmem:[#allocation8 + $0x148] sm:$0xff]
        %v356 = vld [vmem:[#allocation8 + $0x150] sm:$0xff]
        %v357 = vld [vmem:[#allocation8 + $0x158] sm:$0xff]
        %v358 = vld [vmem:[#allocation8 + $0x160] sm:$0xff]
        %v359 = vld [vmem:[#allocation8 + $0x168] sm:$0xff]
        %v360 = vld [vmem:[#allocation8 + $0x170] sm:$0xff]
        %v361 = vld [vmem:[#allocation8 + $0x178] sm:$0xff]
        %v362 = vld [vmem:[#allocation8 + $0x180] sm:$0xff]
        %v363 = vld [vmem:[#allocation8 + $0x188] sm:$0xff]
        %v364 = vld [vmem:[#allocation8 + $0x190] sm:$0xff]
        %v365 = vld [vmem:[#allocation8 + $0x198] sm:$0xff]
        %v366 = vld [vmem:[#allocation8 + $0x1a0] sm:$0xff]
        %v367 = vld [vmem:[#allocation8 + $0x1a8] sm:$0xff]
        %v368 = vld [vmem:[#allocation8 + $0x1b0] sm:$0xff]
        %v369 = vld [vmem:[#allocation8 + $0x1b8] sm:$0xff]
        %v370 = vld [vmem:[#allocation8 + $0x1c0] sm:$0xff]
        %v371 = vld [vmem:[#allocation8 + $0x1c8] sm:$0xff]
        %v372 = vld [vmem:[#allocation8 + $0x1d0] sm:$0xff]
        %v373 = vld [vmem:[#allocation8 + $0x1d8] sm:$0xff]
        %v374 = vld [vmem:[#allocation8 + $0x1e0] sm:$0xff]
        %v375 = vld [vmem:[#allocation8 + $0x1e8] sm:$0xff]
        %v376 = vld [vmem:[#allocation8 + $0x1f0] sm:$0xff]
        %v377 = vld [vmem:[#allocation8 + $0x1f8] sm:$0xff]
        %v378 = vld [vmem:[%s262] sm:$0xff]
        %v379 = vld [vmem:[%s262 + $0x8] sm:$0xff]
        %v380 = vld [vmem:[%s262 + $0x10] sm:$0xff]
        %v381 = vld [vmem:[%s262 + $0x18] sm:$0xff]
        %vm386 = vcmask 1040384
        %v387 = vrot.slane %v378, 7
        %v388 = vrot.slane %v379, 7
        %v389 = vsel %vm386, %v387, %v388
        %v390 = vrot.slane %v380, 7
        %v391 = vrot.slane %v381, 7
        %v392 = vsel %vm386, %v390, %v391
        %v397 = vsel %vm386, 0.0, %v387
        %v398 = vsel %vm386, 0.0, %v390
        %vm399 = vcmask 1046528
        %v400 = vrot.slane %v378, 1
        %v401 = vrot.slane %v379, 1
        %v402 = vsel %vm399, %v400, %v401
        %v403 = vrot.slane %v380, 1
        %v404 = vrot.slane %v381, 1
        %v405 = vsel %vm399, %v403, %v404
        %v410 = vsel %vm399, %v401, 0.0
        %v411 = vsel %vm399, %v404, 0.0
        %v412 = vld [vmem:[#allocation5] sm:$0xff]
        %v413 = vld [vmem:[#allocation5 + $0x8] sm:$0xff]
        %v414 = vld [vmem:[#allocation5 + $0x10] sm:$0xff]
        %v415 = vld [vmem:[#allocation5 + $0x18] sm:$0xff]
        %v416 = vld [vmem:[#allocation5 + $0x20] sm:$0xff]
        %v417 = vld [vmem:[#allocation5 + $0x28] sm:$0xff]
        %v418 = vld [vmem:[#allocation5 + $0x30] sm:$0xff]
        %v419 = vld [vmem:[#allocation5 + $0x38] sm:$0xff]
        %v420 = vld [vmem:[#allocation5 + $0x40] sm:$0xff]
        %v421 = vld [vmem:[#allocation5 + $0x48] sm:$0xff]
        %v422 = vld [vmem:[#allocation5 + $0x50] sm:$0xff]
        %v423 = vld [vmem:[#allocation5 + $0x58] sm:$0xff]
        %v424 = vld [vmem:[#allocation5 + $0x60] sm:$0xff]
        %v425 = vld [vmem:[#allocation5 + $0x68] sm:$0xff]
        %v426 = vld [vmem:[#allocation5 + $0x70] sm:$0xff]
        %v427 = vld [vmem:[#allocation5 + $0x78] sm:$0xff]
        %v428 = vld [vmem:[#allocation5 + $0x80] sm:$0xff]
        %v429 = vld [vmem:[#allocation5 + $0x88] sm:$0xff]
        %v430 = vld [vmem:[#allocation5 + $0x90] sm:$0xff]
        %v431 = vld [vmem:[#allocation5 + $0x98] sm:$0xff]
        %v432 = vld [vmem:[#allocation5 + $0xa0] sm:$0xff]
        %v433 = vld [vmem:[#allocation5 + $0xa8] sm:$0xff]
        %v434 = vld [vmem:[#allocation5 + $0xb0] sm:$0xff]
        %v435 = vld [vmem:[#allocation5 + $0xb8] sm:$0xff]
        %v436 = vld [vmem:[#allocation5 + $0xc0] sm:$0xff]
        %v437 = vld [vmem:[#allocation5 + $0xc8] sm:$0xff]
        %v438 = vld [vmem:[#allocation5 + $0xd0] sm:$0xff]
        %v439 = vld [vmem:[#allocation5 + $0xd8] sm:$0xff]
        %v440 = vld [vmem:[#allocation5 + $0xe0] sm:$0xff]
        %v441 = vld [vmem:[#allocation5 + $0xe8] sm:$0xff]
        %v442 = vld [vmem:[#allocation5 + $0xf0] sm:$0xff]
        %v443 = vld [vmem:[#allocation5 + $0xf8] sm:$0xff]
        %v444 = vld [vmem:[#allocation5 + $0x100] sm:$0xff]
        %v445 = vld [vmem:[#allocation5 + $0x108] sm:$0xff]
        %v446 = vld [vmem:[#allocation5 + $0x110] sm:$0xff]
        %v447 = vld [vmem:[#allocation5 + $0x118] sm:$0xff]
        %v448 = vld [vmem:[#allocation5 + $0x120] sm:$0xff]
        %v449 = vld [vmem:[#allocation5 + $0x128] sm:$0xff]
        %v450 = vld [vmem:[#allocation5 + $0x130] sm:$0xff]
        %v451 = vld [vmem:[#allocation5 + $0x138] sm:$0xff]
        %v452 = vld [vmem:[#allocation5 + $0x140] sm:$0xff]
        %v453 = vld [vmem:[#allocation5 + $0x148] sm:$0xff]
        %v454 = vld [vmem:[#allocation5 + $0x150] sm:$0xff]
        %v455 = vld [vmem:[#allocation5 + $0x158] sm:$0xff]
        %v456 = vld [vmem:[#allocation5 + $0x160] sm:$0xff]
        %v457 = vld [vmem:[#allocation5 + $0x168] sm:$0xff]
        %v458 = vld [vmem:[#allocation5 + $0x170] sm:$0xff]
        %v459 = vld [vmem:[#allocation5 + $0x178] sm:$0xff]
        %v460 = vld [vmem:[#allocation5 + $0x180] sm:$0xff]
        %v461 = vld [vmem:[#allocation5 + $0x188] sm:$0xff]
        %v462 = vld [vmem:[#allocation5 + $0x190] sm:$0xff]
        %v463 = vld [vmem:[#allocation5 + $0x198] sm:$0xff]
        %v464 = vld [vmem:[#allocation5 + $0x1a0] sm:$0xff]
        %v465 = vld [vmem:[#allocation5 + $0x1a8] sm:$0xff]
        %v466 = vld [vmem:[#allocation5 + $0x1b0] sm:$0xff]
        %v467 = vld [vmem:[#allocation5 + $0x1b8] sm:$0xff]
        %v468 = vld [vmem:[#allocation5 + $0x1c0] sm:$0xff]
        %v469 = vld [vmem:[#allocation5 + $0x1c8] sm:$0xff]
        %v470 = vld [vmem:[#allocation5 + $0x1d0] sm:$0xff]
        %v471 = vld [vmem:[#allocation5 + $0x1d8] sm:$0xff]
        %v472 = vld [vmem:[#allocation5 + $0x1e0] sm:$0xff]
        %v473 = vld [vmem:[#allocation5 + $0x1e8] sm:$0xff]
        %v474 = vld [vmem:[#allocation5 + $0x1f0] sm:$0xff]
        %v475 = vld [vmem:[#allocation5 + $0x1f8] sm:$0xff]
        %v476 = vld [vmem:[#allocation5 + $0x200] sm:$0xff]
        %v477 = vld [vmem:[#allocation5 + $0x208] sm:$0xff]
        %v478 = vld [vmem:[#allocation5 + $0x210] sm:$0xff]
        %v479 = vld [vmem:[#allocation5 + $0x218] sm:$0xff]
        %v480 = vld [vmem:[#allocation5 + $0x220] sm:$0xff]
        %v481 = vld [vmem:[#allocation5 + $0x228] sm:$0xff]
        %v482 = vld [vmem:[#allocation5 + $0x230] sm:$0xff]
        %v483 = vld [vmem:[#allocation5 + $0x238] sm:$0xff]
        %v484 = vld [vmem:[#allocation5 + $0x240] sm:$0xff]
        %v485 = vld [vmem:[#allocation5 + $0x248] sm:$0xff]
        %v486 = vld [vmem:[#allocation5 + $0x250] sm:$0xff]
        %v487 = vld [vmem:[#allocation5 + $0x258] sm:$0xff]
        %v488 = vld [vmem:[#allocation5 + $0x260] sm:$0xff]
        %v489 = vld [vmem:[#allocation5 + $0x268] sm:$0xff]
        %v490 = vld [vmem:[#allocation5 + $0x270] sm:$0xff]
        %v491 = vld [vmem:[#allocation5 + $0x278] sm:$0xff]
        %v492 = vld [vmem:[#allocation5 + $0x280] sm:$0xff]
        %v493 = vld [vmem:[#allocation5 + $0x288] sm:$0xff]
        %v494 = vld [vmem:[#allocation5 + $0x290] sm:$0xff]
        %v495 = vld [vmem:[#allocation5 + $0x298] sm:$0xff]
        %v496 = vld [vmem:[#allocation5 + $0x2a0] sm:$0xff]
        %v497 = vld [vmem:[#allocation5 + $0x2a8] sm:$0xff]
        %v498 = vld [vmem:[#allocation5 + $0x2b0] sm:$0xff]
        %v499 = vld [vmem:[#allocation5 + $0x2b8] sm:$0xff]
        %v500 = vld [vmem:[#allocation5 + $0x2c0] sm:$0xff]
        %v501 = vld [vmem:[#allocation5 + $0x2c8] sm:$0xff]
        %v502 = vld [vmem:[#allocation5 + $0x2d0] sm:$0xff]
        %v503 = vld [vmem:[#allocation5 + $0x2d8] sm:$0xff]
        %v504 = vld [vmem:[#allocation5 + $0x2e0] sm:$0xff]
        %v505 = vld [vmem:[#allocation5 + $0x2e8] sm:$0xff]
        %v506 = vld [vmem:[#allocation5 + $0x2f0] sm:$0xff]
        %v507 = vld [vmem:[#allocation5 + $0x2f8] sm:$0xff]
        %508 = vmatpush.msra.mxu0 %v442
        %509 = vmatpush.msra.mxu0 %v440
        %510 = vmatpush.msra.mxu0 %v438
        %511 = vmatpush.msra.mxu0 %v436
        %512 = vmatpush.msra.mxu0 %v434
        %513 = vmatpush.msra.mxu0 %v432
        %514 = vmatpush.msra.mxu0 %v430
        %515 = vmatpush.msra.mxu0 %v428
        %516 = vmatpush.msra.mxu0 %v426
        %517 = vmatpush.msra.mxu0 %v424
        %518 = vmatpush.msra.mxu0 %v422
        %519 = vmatpush.msra.mxu0 %v420
        %520 = vmatpush.msra.mxu0 %v418
        %521 = vmatpush.msra.mxu0 %v416
        %522 = vmatpush.msra.mxu0 %v414
        %523 = vmatpush.msra.mxu0 %v412
        %524 = vmatmul.f32.gmra.mxu0 %v397
        %v525 = vpop.f32.mrf.mxu0
        %v526 = vadd.f32 0.0, %v525
        %527 = vmatmul.f32.gmra.mxu0 %v389
        %v528 = vpop.f32.mrf.mxu0
        %v529 = vadd.f32 0.0, %v528
        %530 = vmatmul.f32.gmra.mxu0 %v398
        %v531 = vpop.f32.mrf.mxu0
        %v532 = vadd.f32 0.0, %v531
        %533 = vmatmul.f32.gmra.mxu0 %v392
        %v534 = vpop.f32.mrf.mxu0
        %v535 = vadd.f32 0.0, %v534
        %536 = vdwg.mxu0
        %537 = vmatpush.msra.mxu0 %v474
        %538 = vmatpush.msra.mxu0 %v472
        %539 = vmatpush.msra.mxu0 %v470
        %540 = vmatpush.msra.mxu0 %v468
        %541 = vmatpush.msra.mxu0 %v466
        %542 = vmatpush.msra.mxu0 %v464
        %543 = vmatpush.msra.mxu0 %v462
        %544 = vmatpush.msra.mxu0 %v460
        %545 = vmatpush.msra.mxu0 %v458
        %546 = vmatpush.msra.mxu0 %v456
        %547 = vmatpush.msra.mxu0 %v454
        %548 = vmatpush.msra.mxu0 %v452
        %549 = vmatpush.msra.mxu0 %v450
        %550 = vmatpush.msra.mxu0 %v448
        %551 = vmatpush.msra.mxu0 %v446
        %552 = vmatpush.msra.mxu0 %v444
        %553 = vmatmul.f32.gmra.mxu0 %v378
        %v554 = vpop.f32.mrf.mxu0
        %v555 = vadd.f32 %v526, %v554
        %556 = vmatmul.f32.gmra.mxu0 %v379
        %v557 = vpop.f32.mrf.mxu0
        %v558 = vadd.f32 %v529, %v557
        %559 = vmatmul.f32.gmra.mxu0 %v380
        %v560 = vpop.f32.mrf.mxu0
        %v561 = vadd.f32 %v532, %v560
        %562 = vmatmul.f32.gmra.mxu0 %v381
        %v563 = vpop.f32.mrf.mxu0
        %v564 = vadd.f32 %v535, %v563
        %565 = vdwg.mxu0
        %566 = vmatpush.msra.mxu0 %v506
        %567 = vmatpush.msra.mxu0 %v504
        %568 = vmatpush.msra.mxu0 %v502
        %569 = vmatpush.msra.mxu0 %v500
        %570 = vmatpush.msra.mxu0 %v498
        %571 = vmatpush.msra.mxu0 %v496
        %572 = vmatpush.msra.mxu0 %v494
        %573 = vmatpush.msra.mxu0 %v492
        %574 = vmatpush.msra.mxu0 %v490
        %575 = vmatpush.msra.mxu0 %v488
        %576 = vmatpush.msra.mxu0 %v486
        %577 = vmatpush.msra.mxu0 %v484
        %578 = vmatpush.msra.mxu0 %v482
        %579 = vmatpush.msra.mxu0 %v480
        %580 = vmatpush.msra.mxu0 %v478
        %581 = vmatpush.msra.mxu0 %v476
        %582 = vmatmul.f32.gmra.mxu0 %v402
        %v583 = vpop.f32.mrf.mxu0
        %v584 = vadd.f32 %v555, %v583
        %585 = vmatmul.f32.gmra.mxu0 %v410
        %v586 = vpop.f32.mrf.mxu0
        %v587 = vadd.f32 %v558, %v586
        %588 = vmatmul.f32.gmra.mxu0 %v405
        %v589 = vpop.f32.mrf.mxu0
        %v590 = vadd.f32 %v561, %v589
        %591 = vmatmul.f32.gmra.mxu0 %v411
        %v592 = vpop.f32.mrf.mxu0
        %v593 = vadd.f32 %v564, %v592
        %594 = vdwg.mxu0
        %595 = vmatpush.msra.mxu0 %v443
        %596 = vmatpush.msra.mxu0 %v441
        %597 = vmatpush.msra.mxu0 %v439
        %598 = vmatpush.msra.mxu0 %v437
        %599 = vmatpush.msra.mxu0 %v435
        %600 = vmatpush.msra.mxu0 %v433
        %601 = vmatpush.msra.mxu0 %v431
        %602 = vmatpush.msra.mxu0 %v429
        %603 = vmatpush.msra.mxu0 %v427
        %604 = vmatpush.msra.mxu0 %v425
        %605 = vmatpush.msra.mxu0 %v423
        %606 = vmatpush.msra.mxu0 %v421
        %607 = vmatpush.msra.mxu0 %v419
        %608 = vmatpush.msra.mxu0 %v417
        %609 = vmatpush.msra.mxu0 %v415
        %610 = vmatpush.msra.mxu0 %v413
        %611 = vmatmul.f32.gmra.mxu0 %v397
        %v612 = vpop.f32.mrf.mxu0
        %v613 = vadd.f32 0.0, %v612
        %614 = vmatmul.f32.gmra.mxu0 %v389
        %v615 = vpop.f32.mrf.mxu0
        %v616 = vadd.f32 0.0, %v615
        %617 = vmatmul.f32.gmra.mxu0 %v398
        %v618 = vpop.f32.mrf.mxu0
        %v619 = vadd.f32 0.0, %v618
        %620 = vmatmul.f32.gmra.mxu0 %v392
        %v621 = vpop.f32.mrf.mxu0
        %v622 = vadd.f32 0.0, %v621
        %623 = vdwg.mxu0
        %624 = vmatpush.msra.mxu0 %v475
        %625 = vmatpush.msra.mxu0 %v473
        %626 = vmatpush.msra.mxu0 %v471
        %627 = vmatpush.msra.mxu0 %v469
        %628 = vmatpush.msra.mxu0 %v467
        %629 = vmatpush.msra.mxu0 %v465
        %630 = vmatpush.msra.mxu0 %v463
        %631 = vmatpush.msra.mxu0 %v461
        %632 = vmatpush.msra.mxu0 %v459
        %633 = vmatpush.msra.mxu0 %v457
        %634 = vmatpush.msra.mxu0 %v455
        %635 = vmatpush.msra.mxu0 %v453
        %636 = vmatpush.msra.mxu0 %v451
        %637 = vmatpush.msra.mxu0 %v449
        %638 = vmatpush.msra.mxu0 %v447
        %639 = vmatpush.msra.mxu0 %v445
        %640 = vmatmul.f32.gmra.mxu0 %v378
        %v641 = vpop.f32.mrf.mxu0
        %v642 = vadd.f32 %v613, %v641
        %643 = vmatmul.f32.gmra.mxu0 %v379
        %v644 = vpop.f32.mrf.mxu0
        %v645 = vadd.f32 %v616, %v644
        %646 = vmatmul.f32.gmra.mxu0 %v380
        %v647 = vpop.f32.mrf.mxu0
        %v648 = vadd.f32 %v619, %v647
        %649 = vmatmul.f32.gmra.mxu0 %v381
        %v650 = vpop.f32.mrf.mxu0
        %v651 = vadd.f32 %v622, %v650
        %652 = vdwg.mxu0
        %653 = vmatpush.msra.mxu0 %v507
        %654 = vmatpush.msra.mxu0 %v505
        %655 = vmatpush.msra.mxu0 %v503
        %656 = vmatpush.msra.mxu0 %v501
        %657 = vmatpush.msra.mxu0 %v499
        %658 = vmatpush.msra.mxu0 %v497
        %659 = vmatpush.msra.mxu0 %v495
        %660 = vmatpush.msra.mxu0 %v493
        %661 = vmatpush.msra.mxu0 %v491
        %662 = vmatpush.msra.mxu0 %v489
        %663 = vmatpush.msra.mxu0 %v487
        %664 = vmatpush.msra.mxu0 %v485
        %665 = vmatpush.msra.mxu0 %v483
        %666 = vmatpush.msra.mxu0 %v481
        %667 = vmatpush.msra.mxu0 %v479
        %668 = vmatpush.msra.mxu0 %v477
        %669 = vmatmul.f32.gmra.mxu0 %v402
        %v670 = vpop.f32.mrf.mxu0
        %v671 = vadd.f32 %v642, %v670
        %672 = vmatmul.f32.gmra.mxu0 %v410
        %v673 = vpop.f32.mrf.mxu0
        %v674 = vadd.f32 %v645, %v673
        %675 = vmatmul.f32.gmra.mxu0 %v405
        %v676 = vpop.f32.mrf.mxu0
        %v677 = vadd.f32 %v648, %v676
        %678 = vmatmul.f32.gmra.mxu0 %v411
        %v679 = vpop.f32.mrf.mxu0
        %v680 = vadd.f32 %v651, %v679
        %681 = vdwg.mxu0
        %v682 = vperm.slane %v312, 0
        %v683 = vperm.slane %v313, 0
        %v684 = vadd.f32 %v584, %v682
        %v685 = vadd.f32 %v671, %v683
        %v686 = vadd.f32 %v587, %v682
        %v687 = vadd.f32 %v674, %v683
        %v688 = vadd.f32 %v590, %v682
        %v689 = vadd.f32 %v677, %v683
        %v690 = vadd.f32 %v593, %v682
        %v691 = vadd.f32 %v680, %v683
        %v692 = vadd.f32 %v684, %v686
        %v693 = vrot.slane %v692, 4
        %v694 = vadd.f32 %v692, %v693
        %v695 = vrot.slane %v694, 2
        %v696 = vadd.f32 %v694, %v695
        %v697 = vrot.slane %v696, 1
        %v698 = vadd.f32 %v696, %v697
        %v699 = vadd.f32 %v685, %v687
        %v700 = vrot.slane %v699, 4
        %v701 = vadd.f32 %v699, %v700
        %v702 = vrot.slane %v701, 2
        %v703 = vadd.f32 %v701, %v702
        %v704 = vrot.slane %v703, 1
        %v705 = vadd.f32 %v703, %v704
        %v706 = vadd.f32 %v688, %v690
        %v707 = vrot.slane %v706, 4
        %v708 = vadd.f32 %v706, %v707
        %v709 = vrot.slane %v708, 2
        %v710 = vadd.f32 %v708, %v709
        %v711 = vrot.slane %v710, 1
        %v712 = vadd.f32 %v710, %v711
        %v713 = vadd.f32 %v689, %v691
        %v714 = vrot.slane %v713, 4
        %v715 = vadd.f32 %v713, %v714
        %v716 = vrot.slane %v715, 2
        %v717 = vadd.f32 %v715, %v716
        %v718 = vrot.slane %v717, 1
        %v719 = vadd.f32 %v717, %v718
        %vm724 = vcmask 1041409
        %v725 = vsel %vm724, %v712, %v698
        %v726 = vsel %vm724, %v719, %v705
        %729 = vmatpush.msra.mxu0 %v344
        %730 = vmatpush.msra.mxu0 %v342
        %731 = vmatpush.msra.mxu0 %v340
        %732 = vmatpush.msra.mxu0 %v338
        %733 = vmatpush.msra.mxu0 %v336
        %734 = vmatpush.msra.mxu0 %v334
        %735 = vmatpush.msra.mxu0 %v332
        %736 = vmatpush.msra.mxu0 %v330
        %737 = vmatpush.msra.mxu0 %v328
        %738 = vmatpush.msra.mxu0 %v326
        %739 = vmatpush.msra.mxu0 %v324
        %740 = vmatpush.msra.mxu0 %v322
        %741 = vmatpush.msra.mxu0 %v320
        %742 = vmatpush.msra.mxu0 %v318
        %743 = vmatpush.msra.mxu0 %v316
        %744 = vmatpush.msra.mxu0 %v314
        %745 = vmatmul.f32.gmra.mxu0 %v725
        %v746 = vpop.f32.mrf.mxu0
        %v747 = vadd.f32 0.0, %v746
        %748 = vdwg.mxu0
        %749 = vmatpush.msra.mxu0 %v376
        %750 = vmatpush.msra.mxu0 %v374
        %751 = vmatpush.msra.mxu0 %v372
        %752 = vmatpush.msra.mxu0 %v370
        %753 = vmatpush.msra.mxu0 %v368
        %754 = vmatpush.msra.mxu0 %v366
        %755 = vmatpush.msra.mxu0 %v364
        %756 = vmatpush.msra.mxu0 %v362
        %757 = vmatpush.msra.mxu0 %v360
        %758 = vmatpush.msra.mxu0 %v358
        %759 = vmatpush.msra.mxu0 %v356
        %760 = vmatpush.msra.mxu0 %v354
        %761 = vmatpush.msra.mxu0 %v352
        %762 = vmatpush.msra.mxu0 %v350
        %763 = vmatpush.msra.mxu0 %v348
        %764 = vmatpush.msra.mxu0 %v346
        %765 = vmatmul.f32.gmra.mxu0 %v726
        %v766 = vpop.f32.mrf.mxu0
        %v767 = vadd.f32 %v747, %v766
        %768 = vdwg.mxu0
        %769 = vmatpush.msra.mxu0 %v345
        %770 = vmatpush.msra.mxu0 %v343
        %771 = vmatpush.msra.mxu0 %v341
        %772 = vmatpush.msra.mxu0 %v339
        %773 = vmatpush.msra.mxu0 %v337
        %774 = vmatpush.msra.mxu0 %v335
        %775 = vmatpush.msra.mxu0 %v333
        %776 = vmatpush.msra.mxu0 %v331
        %777 = vmatpush.msra.mxu0 %v329
        %778 = vmatpush.msra.mxu0 %v327
        %779 = vmatpush.msra.mxu0 %v325
        %780 = vmatpush.msra.mxu0 %v323
        %781 = vmatpush.msra.mxu0 %v321
        %782 = vmatpush.msra.mxu0 %v319
        %783 = vmatpush.msra.mxu0 %v317
        %784 = vmatpush.msra.mxu0 %v315
        %785 = vmatmul.f32.gmra.mxu0 %v725
        %v786 = vpop.f32.mrf.mxu0
        %v787 = vadd.f32 0.0, %v786
        %788 = vdwg.mxu0
        %789 = vmatpush.msra.mxu0 %v377
        %790 = vmatpush.msra.mxu0 %v375
        %791 = vmatpush.msra.mxu0 %v373
        %792 = vmatpush.msra.mxu0 %v371
        %793 = vmatpush.msra.mxu0 %v369
        %794 = vmatpush.msra.mxu0 %v367
        %795 = vmatpush.msra.mxu0 %v365
        %796 = vmatpush.msra.mxu0 %v363
        %797 = vmatpush.msra.mxu0 %v361
        %798 = vmatpush.msra.mxu0 %v359
        %799 = vmatpush.msra.mxu0 %v357
        %800 = vmatpush.msra.mxu0 %v355
        %801 = vmatpush.msra.mxu0 %v353
        %802 = vmatpush.msra.mxu0 %v351
        %803 = vmatpush.msra.mxu0 %v349
        %804 = vmatpush.msra.mxu0 %v347
        %805 = vmatmul.f32.gmra.mxu0 %v726
        %v806 = vpop.f32.mrf.mxu0
        %v807 = vadd.f32 %v787, %v806
        %808 = vdwg.mxu0
        %v809 = vmul.f32 %v767, 0.00390625
        %v810 = vmul.f32 %v807, 0.00390625
        %v813 = vrot.slane %v810, 7
        %v814 = vsel %vm386, %v809, %v813
        %v815 = vsel %vm724, %v809, %v813
        %v816 = vrot.slane %v815, 1
        %v817 = vperm.slane %v814, 0
        %v818 = vperm.slane %v814, 1
        %v819 = vperm.slane %v816, 0
        %v820 = vperm.slane %v816, 1
        %v825 = vsub.f32 %v684, %v817
        %v826 = vsub.f32 %v685, %v818
        %v827 = vsub.f32 %v686, %v817
        %v828 = vsub.f32 %v687, %v818
        %v829 = vsub.f32 %v688, %v819
        %v830 = vsub.f32 %v689, %v820
        %v831 = vsub.f32 %v690, %v819
        %v832 = vsub.f32 %v691, %v820
        %v833 = vmul.f32 %v825, %v825
        %v834 = vmul.f32 %v826, %v826
        %v835 = vmul.f32 %v827, %v827
        %v836 = vmul.f32 %v828, %v828
        %v837 = vmul.f32 %v829, %v829
        %v838 = vmul.f32 %v830, %v830
        %v839 = vmul.f32 %v831, %v831
        %v840 = vmul.f32 %v832, %v832
        %v841 = vadd.f32 %v833, %v835
        %v842 = vrot.slane %v841, 4
        %v843 = vadd.f32 %v841, %v842
        %v844 = vrot.slane %v843, 2
        %v845 = vadd.f32 %v843, %v844
        %v846 = vrot.slane %v845, 1
        %v847 = vadd.f32 %v845, %v846
        %v848 = vadd.f32 %v834, %v836
        %v849 = vrot.slane %v848, 4
        %v850 = vadd.f32 %v848, %v849
        %v851 = vrot.slane %v850, 2
        %v852 = vadd.f32 %v850, %v851
        %v853 = vrot.slane %v852, 1
        %v854 = vadd.f32 %v852, %v853
        %v855 = vadd.f32 %v837, %v839
        %v856 = vrot.slane %v855, 4
        %v857 = vadd.f32 %v855, %v856
        %v858 = vrot.slane %v857, 2
        %v859 = vadd.f32 %v857, %v858
        %v860 = vrot.slane %v859, 1
        %v861 = vadd.f32 %v859, %v860
        %v862 = vadd.f32 %v838, %v840
        %v863 = vrot.slane %v862, 4
        %v864 = vadd.f32 %v862, %v863
        %v865 = vrot.slane %v864, 2
        %v866 = vadd.f32 %v864, %v865
        %v867 = vrot.slane %v866, 1
        %v868 = vadd.f32 %v866, %v867
        %v873 = vsel %vm724, %v861, %v847
        %v874 = vsel %vm724, %v868, %v854
        %877 = vmatpush.msra.mxu0 %v344
        %878 = vmatpush.msra.mxu0 %v342
        %879 = vmatpush.msra.mxu0 %v340
        %880 = vmatpush.msra.mxu0 %v338
        %881 = vmatpush.msra.mxu0 %v336
        %882 = vmatpush.msra.mxu0 %v334
        %883 = vmatpush.msra.mxu0 %v332
        %884 = vmatpush.msra.mxu0 %v330
        %885 = vmatpush.msra.mxu0 %v328
        %886 = vmatpush.msra.mxu0 %v326
        %887 = vmatpush.msra.mxu0 %v324
        %888 = vmatpush.msra.mxu0 %v322
        %889 = vmatpush.msra.mxu0 %v320
        %890 = vmatpush.msra.mxu0 %v318
        %891 = vmatpush.msra.mxu0 %v316
        %892 = vmatpush.msra.mxu0 %v314
        %893 = vmatmul.f32.gmra.mxu0 %v873
        %v894 = vpop.f32.mrf.mxu0
        %v895 = vadd.f32 0.0, %v894
        %896 = vdwg.mxu0
        %897 = vmatpush.msra.mxu0 %v376
        %898 = vmatpush.msra.mxu0 %v374
        %899 = vmatpush.msra.mxu0 %v372
        %900 = vmatpush.msra.mxu0 %v370
        %901 = vmatpush.msra.mxu0 %v368
        %902 = vmatpush.msra.mxu0 %v366
        %903 = vmatpush.msra.mxu0 %v364
        %904 = vmatpush.msra.mxu0 %v362
        %905 = vmatpush.msra.mxu0 %v360
        %906 = vmatpush.msra.mxu0 %v358
        %907 = vmatpush.msra.mxu0 %v356
        %908 = vmatpush.msra.mxu0 %v354
        %909 = vmatpush.msra.mxu0 %v352
        %910 = vmatpush.msra.mxu0 %v350
        %911 = vmatpush.msra.mxu0 %v348
        %912 = vmatpush.msra.mxu0 %v346
        %913 = vmatmul.f32.gmra.mxu0 %v874
        %v914 = vpop.f32.mrf.mxu0
        %v915 = vadd.f32 %v895, %v914
        %916 = vdwg.mxu0
        %917 = vmatpush.msra.mxu0 %v345
        %918 = vmatpush.msra.mxu0 %v343
        %919 = vmatpush.msra.mxu0 %v341
        %920 = vmatpush.msra.mxu0 %v339
        %921 = vmatpush.msra.mxu0 %v337
        %922 = vmatpush.msra.mxu0 %v335
        %923 = vmatpush.msra.mxu0 %v333
        %924 = vmatpush.msra.mxu0 %v331
        %925 = vmatpush.msra.mxu0 %v329
        %926 = vmatpush.msra.mxu0 %v327
        %927 = vmatpush.msra.mxu0 %v325
        %928 = vmatpush.msra.mxu0 %v323
        %929 = vmatpush.msra.mxu0 %v321
        %930 = vmatpush.msra.mxu0 %v319
        %931 = vmatpush.msra.mxu0 %v317
        %932 = vmatpush.msra.mxu0 %v315
        %933 = vmatmul.f32.gmra.mxu0 %v873
        %v934 = vpop.f32.mrf.mxu0
        %v935 = vadd.f32 0.0, %v934
        %936 = vdwg.mxu0
        %937 = vmatpush.msra.mxu0 %v377
        %938 = vmatpush.msra.mxu0 %v375
        %939 = vmatpush.msra.mxu0 %v373
        %940 = vmatpush.msra.mxu0 %v371
        %941 = vmatpush.msra.mxu0 %v369
        %942 = vmatpush.msra.mxu0 %v367
        %943 = vmatpush.msra.mxu0 %v365
        %944 = vmatpush.msra.mxu0 %v363
        %945 = vmatpush.msra.mxu0 %v361
        %946 = vmatpush.msra.mxu0 %v359
        %947 = vmatpush.msra.mxu0 %v357
        %948 = vmatpush.msra.mxu0 %v355
        %949 = vmatpush.msra.mxu0 %v353
        %950 = vmatpush.msra.mxu0 %v351
        %951 = vmatpush.msra.mxu0 %v349
        %952 = vmatpush.msra.mxu0 %v347
        %953 = vmatmul.f32.gmra.mxu0 %v874
        %v954 = vpop.f32.mrf.mxu0
        %v955 = vadd.f32 %v935, %v954
        %956 = vdwg.mxu0
        %v957 = vmul.f32 %v915, 0.00390625
        %v958 = vmul.f32 %v955, 0.00390625
        %v959 = vadd.f32 %v957, 1e-05
        %v960 = vadd.f32 %v958, 1e-05
        %v961 = vrsqrt.pop %v959
        %v962 = vmul.f32 %v961, %v959
        %v963 = vmul.f32 %v962, %v961
        %v964 = vmul.f32 0.5, %v963
        %v965 = vsub.f32 1.5, %v964
        %v966 = vmul.f32 %v961, %v965
        %vm967 = vweird.f32 %v959
        %vm968 = vweird.f32 %v961
        %vm969 = vmor %vm967, %vm968
        %v970 = vsel %vm969, %v961, %v966
        %v971 = vrsqrt.pop %v960
        %v972 = vmul.f32 %v971, %v960
        %v973 = vmul.f32 %v972, %v971
        %v974 = vmul.f32 0.5, %v973
        %v975 = vsub.f32 1.5, %v974
        %v976 = vmul.f32 %v971, %v975
        %vm977 = vweird.f32 %v960
        %vm978 = vweird.f32 %v971
        %vm979 = vmor %vm977, %vm978
        %v980 = vsel %vm979, %v971, %v976
        %v983 = vrot.slane %v980, 7
        %v984 = vsel %vm386, %v970, %v983
        %v985 = vsel %vm724, %v970, %v983
        %v986 = vrot.slane %v985, 1
        %v987 = vperm.slane %v984, 0
        %v988 = vperm.slane %v984, 1
        %v989 = vperm.slane %v986, 0
        %v990 = vperm.slane %v986, 1
        %v995 = vmul.f32 %v825, %v987
        %v996 = vmul.f32 %v826, %v988
        %v997 = vmul.f32 %v827, %v987
        %v998 = vmul.f32 %v828, %v988
        %v999 = vmul.f32 %v829, %v989
        %v1000 = vmul.f32 %v830, %v990
        %v1001 = vmul.f32 %v831, %v989
        %v1002 = vmul.f32 %v832, %v990
        %v1003 = vperm.slane %v312, 1
        %v1004 = vperm.slane %v313, 1
        %v1005 = vmul.f32 %v995, %v1003
        %v1006 = vmul.f32 %v996, %v1004
        %v1007 = vmul.f32 %v997, %v1003
        %v1008 = vmul.f32 %v998, %v1004
        %v1009 = vmul.f32 %v999, %v1003
        %v1010 = vmul.f32 %v1000, %v1004
        %v1011 = vmul.f32 %v1001, %v1003
        %v1012 = vmul.f32 %v1002, %v1004
        %v1013 = vperm.slane %v312, 2
        %v1014 = vperm.slane %v313, 2
        %v1015 = vadd.f32 %v1005, %v1013
        %v1016 = vadd.f32 %v1006, %v1014
        %v1017 = vadd.f32 %v1007, %v1013
        %v1018 = vadd.f32 %v1008, %v1014
        %v1019 = vadd.f32 %v1009, %v1013
        %v1020 = vadd.f32 %v1010, %v1014
        %v1021 = vadd.f32 %v1011, %v1013
        %v1022 = vadd.f32 %v1012, %v1014
        %vm1023 = vcmp.gt.f32.partialorder %v1015, 0.0
        %vm1024 = vcmp.gt.f32.partialorder %v1017, 0.0
        %vm1025 = vcmp.gt.f32.partialorder %v1019, 0.0
        %vm1026 = vcmp.gt.f32.partialorder %v1021, 0.0
        %v1027 = vmul.f32 %v1015, 0.01
        %v1028 = vmul.f32 %v1017, 0.01
        %v1029 = vmul.f32 %v1019, 0.01
        %v1030 = vmul.f32 %v1021, 0.01
        %v1031 = vsel %vm1023, %v1015, %v1027
        %v1032 = vsel %vm1024, %v1017, %v1028
        %v1033 = vsel %vm1025, %v1019, %v1029
        %v1034 = vsel %vm1026, %v1021, %v1030
        %v1039 = vrot.slane %v1031, 7
        %v1040 = vrot.slane %v1032, 7
        %v1041 = vsel %vm386, %v1039, %v1040
        %v1042 = vrot.slane %v1033, 7
        %v1043 = vrot.slane %v1034, 7
        %v1044 = vsel %vm386, %v1042, %v1043
        %v1049 = vsel %vm386, 0.0, %v1039
        %v1050 = vsel %vm386, 0.0, %v1042
        %v1051 = vrot.slane %v1031, 1
        %v1052 = vrot.slane %v1032, 1
        %v1053 = vsel %vm399, %v1051, %v1052
        %v1054 = vrot.slane %v1033, 1
        %v1055 = vrot.slane %v1034, 1
        %v1056 = vsel %vm399, %v1054, %v1055
        %v1061 = vsel %vm399, %v1052, 0.0
        %v1062 = vsel %vm399, %v1055, 0.0
        %v1063 = vld [vmem:[#allocation7] sm:$0xff]
        %v1064 = vld [vmem:[#allocation7 + $0x8] sm:$0xff]
        %v1065 = vld [vmem:[#allocation7 + $0x10] sm:$0xff]
        %v1066 = vld [vmem:[#allocation7 + $0x18] sm:$0xff]
        %v1067 = vld [vmem:[#allocation7 + $0x20] sm:$0xff]
        %v1068 = vld [vmem:[#allocation7 + $0x28] sm:$0xff]
        %v1069 = vld [vmem:[#allocation7 + $0x30] sm:$0xff]
        %v1070 = vld [vmem:[#allocation7 + $0x38] sm:$0xff]
        %v1071 = vld [vmem:[#allocation7 + $0x40] sm:$0xff]
        %v1072 = vld [vmem:[#allocation7 + $0x48] sm:$0xff]
        %v1073 = vld [vmem:[#allocation7 + $0x50] sm:$0xff]
        %v1074 = vld [vmem:[#allocation7 + $0x58] sm:$0xff]
        %v1075 = vld [vmem:[#allocation7 + $0x60] sm:$0xff]
        %v1076 = vld [vmem:[#allocation7 + $0x68] sm:$0xff]
        %v1077 = vld [vmem:[#allocation7 + $0x70] sm:$0xff]
        %v1078 = vld [vmem:[#allocation7 + $0x78] sm:$0xff]
        %v1079 = vld [vmem:[#allocation7 + $0x80] sm:$0xff]
        %v1080 = vld [vmem:[#allocation7 + $0x88] sm:$0xff]
        %v1081 = vld [vmem:[#allocation7 + $0x90] sm:$0xff]
        %v1082 = vld [vmem:[#allocation7 + $0x98] sm:$0xff]
        %v1083 = vld [vmem:[#allocation7 + $0xa0] sm:$0xff]
        %v1084 = vld [vmem:[#allocation7 + $0xa8] sm:$0xff]
        %v1085 = vld [vmem:[#allocation7 + $0xb0] sm:$0xff]
        %v1086 = vld [vmem:[#allocation7 + $0xb8] sm:$0xff]
        %v1087 = vld [vmem:[#allocation7 + $0xc0] sm:$0xff]
        %v1088 = vld [vmem:[#allocation7 + $0xc8] sm:$0xff]
        %v1089 = vld [vmem:[#allocation7 + $0xd0] sm:$0xff]
        %v1090 = vld [vmem:[#allocation7 + $0xd8] sm:$0xff]
        %v1091 = vld [vmem:[#allocation7 + $0xe0] sm:$0xff]
        %v1092 = vld [vmem:[#allocation7 + $0xe8] sm:$0xff]
        %v1093 = vld [vmem:[#allocation7 + $0xf0] sm:$0xff]
        %v1094 = vld [vmem:[#allocation7 + $0xf8] sm:$0xff]
        %v1095 = vld [vmem:[#allocation7 + $0x100] sm:$0xff]
        %v1096 = vld [vmem:[#allocation7 + $0x108] sm:$0xff]
        %v1097 = vld [vmem:[#allocation7 + $0x110] sm:$0xff]
        %v1098 = vld [vmem:[#allocation7 + $0x118] sm:$0xff]
        %v1099 = vld [vmem:[#allocation7 + $0x120] sm:$0xff]
        %v1100 = vld [vmem:[#allocation7 + $0x128] sm:$0xff]
        %v1101 = vld [vmem:[#allocation7 + $0x130] sm:$0xff]
        %v1102 = vld [vmem:[#allocation7 + $0x138] sm:$0xff]
        %v1103 = vld [vmem:[#allocation7 + $0x140] sm:$0xff]
        %v1104 = vld [vmem:[#allocation7 + $0x148] sm:$0xff]
        %v1105 = vld [vmem:[#allocation7 + $0x150] sm:$0xff]
        %v1106 = vld [vmem:[#allocation7 + $0x158] sm:$0xff]
        %v1107 = vld [vmem:[#allocation7 + $0x160] sm:$0xff]
        %v1108 = vld [vmem:[#allocation7 + $0x168] sm:$0xff]
        %v1109 = vld [vmem:[#allocation7 + $0x170] sm:$0xff]
        %v1110 = vld [vmem:[#allocation7 + $0x178] sm:$0xff]
        %1111 = vmatpush.msra.mxu0 %v1078
        %1112 = vmatpush.msra.mxu0 %v1077
        %1113 = vmatpush.msra.mxu0 %v1076
        %1114 = vmatpush.msra.mxu0 %v1075
        %1115 = vmatpush.msra.mxu0 %v1074
        %1116 = vmatpush.msra.mxu0 %v1073
        %1117 = vmatpush.msra.mxu0 %v1072
        %1118 = vmatpush.msra.mxu0 %v1071
        %1119 = vmatpush.msra.mxu0 %v1070
        %1120 = vmatpush.msra.mxu0 %v1069
        %1121 = vmatpush.msra.mxu0 %v1068
        %1122 = vmatpush.msra.mxu0 %v1067
        %1123 = vmatpush.msra.mxu0 %v1066
        %1124 = vmatpush.msra.mxu0 %v1065
        %1125 = vmatpush.msra.mxu0 %v1064
        %1126 = vmatpush.msra.mxu0 %v1063
        %1127 = vmatmul.f32.gmra.mxu0 %v1049
        %v1128 = vpop.f32.mrf.mxu0
        %v1129 = vadd.f32 0.0, %v1128
        %1130 = vmatmul.f32.gmra.mxu0 %v1041
        %v1131 = vpop.f32.mrf.mxu0
        %v1132 = vadd.f32 0.0, %v1131
        %1133 = vmatmul.f32.gmra.mxu0 %v1050
        %v1134 = vpop.f32.mrf.mxu0
        %v1135 = vadd.f32 0.0, %v1134
        %1136 = vmatmul.f32.gmra.mxu0 %v1044
        %v1137 = vpop.f32.mrf.mxu0
        %v1138 = vadd.f32 0.0, %v1137
        %1139 = vdwg.mxu0
        %1140 = vmatpush.msra.mxu0 %v1094
        %1141 = vmatpush.msra.mxu0 %v1093
        %1142 = vmatpush.msra.mxu0 %v1092
        %1143 = vmatpush.msra.mxu0 %v1091
        %1144 = vmatpush.msra.mxu0 %v1090
        %1145 = vmatpush.msra.mxu0 %v1089
        %1146 = vmatpush.msra.mxu0 %v1088
        %1147 = vmatpush.msra.mxu0 %v1087
        %1148 = vmatpush.msra.mxu0 %v1086
        %1149 = vmatpush.msra.mxu0 %v1085
        %1150 = vmatpush.msra.mxu0 %v1084
        %1151 = vmatpush.msra.mxu0 %v1083
        %1152 = vmatpush.msra.mxu0 %v1082
        %1153 = vmatpush.msra.mxu0 %v1081
        %1154 = vmatpush.msra.mxu0 %v1080
        %1155 = vmatpush.msra.mxu0 %v1079
        %1156 = vmatmul.f32.gmra.mxu0 %v1031
        %v1157 = vpop.f32.mrf.mxu0
        %v1158 = vadd.f32 %v1129, %v1157
        %1159 = vmatmul.f32.gmra.mxu0 %v1032
        %v1160 = vpop.f32.mrf.mxu0
        %v1161 = vadd.f32 %v1132, %v1160
        %1162 = vmatmul.f32.gmra.mxu0 %v1033
        %v1163 = vpop.f32.mrf.mxu0
        %v1164 = vadd.f32 %v1135, %v1163
        %1165 = vmatmul.f32.gmra.mxu0 %v1034
        %v1166 = vpop.f32.mrf.mxu0
        %v1167 = vadd.f32 %v1138, %v1166
        %1168 = vdwg.mxu0
        %1169 = vmatpush.msra.mxu0 %v1110
        %1170 = vmatpush.msra.mxu0 %v1109
        %1171 = vmatpush.msra.mxu0 %v1108
        %1172 = vmatpush.msra.mxu0 %v1107
        %1173 = vmatpush.msra.mxu0 %v1106
        %1174 = vmatpush.msra.mxu0 %v1105
        %1175 = vmatpush.msra.mxu0 %v1104
        %1176 = vmatpush.msra.mxu0 %v1103
        %1177 = vmatpush.msra.mxu0 %v1102
        %1178 = vmatpush.msra.mxu0 %v1101
        %1179 = vmatpush.msra.mxu0 %v1100
        %1180 = vmatpush.msra.mxu0 %v1099
        %1181 = vmatpush.msra.mxu0 %v1098
        %1182 = vmatpush.msra.mxu0 %v1097
        %1183 = vmatpush.msra.mxu0 %v1096
        %1184 = vmatpush.msra.mxu0 %v1095
        %1185 = vmatmul.f32.gmra.mxu0 %v1053
        %v1186 = vpop.f32.mrf.mxu0
        %v1187 = vadd.f32 %v1158, %v1186
        %1188 = vmatmul.f32.gmra.mxu0 %v1061
        %v1189 = vpop.f32.mrf.mxu0
        %v1190 = vadd.f32 %v1161, %v1189
        %1191 = vmatmul.f32.gmra.mxu0 %v1056
        %v1192 = vpop.f32.mrf.mxu0
        %v1193 = vadd.f32 %v1164, %v1192
        %1194 = vmatmul.f32.gmra.mxu0 %v1062
        %v1195 = vpop.f32.mrf.mxu0
        %v1196 = vadd.f32 %v1167, %v1195
        %1197 = vdwg.mxu0
        %v1198 = vperm.slane %v312, 3
        %v1199 = vadd.f32 %v1187, %v1198
        %v1200 = vadd.f32 %v1190, %v1198
        %v1201 = vadd.f32 %v1193, %v1198
        %v1202 = vadd.f32 %v1196, %v1198
        %v1203 = vadd.f32 %v1199, %v1200
        %v1204 = vrot.slane %v1203, 4
        %v1205 = vadd.f32 %v1203, %v1204
        %v1206 = vrot.slane %v1205, 2
        %v1207 = vadd.f32 %v1205, %v1206
        %v1208 = vrot.slane %v1207, 1
        %v1209 = vadd.f32 %v1207, %v1208
        %v1210 = vadd.f32 %v1201, %v1202
        %v1211 = vrot.slane %v1210, 4
        %v1212 = vadd.f32 %v1210, %v1211
        %v1213 = vrot.slane %v1212, 2
        %v1214 = vadd.f32 %v1212, %v1213
        %v1215 = vrot.slane %v1214, 1
        %v1216 = vadd.f32 %v1214, %v1215
        %v1219 = vsel %vm724, %v1216, %v1209
        %1221 = vmatpush.msra.mxu0 %v344
        %1222 = vmatpush.msra.mxu0 %v342
        %1223 = vmatpush.msra.mxu0 %v340
        %1224 = vmatpush.msra.mxu0 %v338
        %1225 = vmatpush.msra.mxu0 %v336
        %1226 = vmatpush.msra.mxu0 %v334
        %1227 = vmatpush.msra.mxu0 %v332
        %1228 = vmatpush.msra.mxu0 %v330
        %1229 = vmatpush.msra.mxu0 %v328
        %1230 = vmatpush.msra.mxu0 %v326
        %1231 = vmatpush.msra.mxu0 %v324
        %1232 = vmatpush.msra.mxu0 %v322
        %1233 = vmatpush.msra.mxu0 %v320
        %1234 = vmatpush.msra.mxu0 %v318
        %1235 = vmatpush.msra.mxu0 %v316
        %1236 = vmatpush.msra.mxu0 %v314
        %1237 = vmatmul.f32.gmra.mxu0 %v1219
        %v1238 = vpop.f32.mrf.mxu0
        %v1239 = vadd.f32 0.0, %v1238
        %1240 = vdwg.mxu0
        %v1241 = vmul.f32 %v1239, 0.00390625
        %v1243 = vrot.slane %v1241, 1
        %v1244 = vperm.slane %v1241, 0
        %v1245 = vperm.slane %v1243, 0
        %v1248 = vsub.f32 %v1199, %v1244
        %v1249 = vsub.f32 %v1200, %v1244
        %v1250 = vsub.f32 %v1201, %v1245
        %v1251 = vsub.f32 %v1202, %v1245
        %v1252 = vmul.f32 %v1248, %v1248
        %v1253 = vmul.f32 %v1249, %v1249
        %v1254 = vmul.f32 %v1250, %v1250
        %v1255 = vmul.f32 %v1251, %v1251
        %v1256 = vadd.f32 %v1252, %v1253
        %v1257 = vrot.slane %v1256, 4
        %v1258 = vadd.f32 %v1256, %v1257
        %v1259 = vrot.slane %v1258, 2
        %v1260 = vadd.f32 %v1258, %v1259
        %v1261 = vrot.slane %v1260, 1
        %v1262 = vadd.f32 %v1260, %v1261
        %v1263 = vadd.f32 %v1254, %v1255
        %v1264 = vrot.slane %v1263, 4
        %v1265 = vadd.f32 %v1263, %v1264
        %v1266 = vrot.slane %v1265, 2
        %v1267 = vadd.f32 %v1265, %v1266
        %v1268 = vrot.slane %v1267, 1
        %v1269 = vadd.f32 %v1267, %v1268
        %v1272 = vsel %vm724, %v1269, %v1262
        %1274 = vmatpush.msra.mxu0 %v344
        %1275 = vmatpush.msra.mxu0 %v342
        %1276 = vmatpush.msra.mxu0 %v340
        %1277 = vmatpush.msra.mxu0 %v338
        %1278 = vmatpush.msra.mxu0 %v336
        %1279 = vmatpush.msra.mxu0 %v334
        %1280 = vmatpush.msra.mxu0 %v332
        %1281 = vmatpush.msra.mxu0 %v330
        %1282 = vmatpush.msra.mxu0 %v328
        %1283 = vmatpush.msra.mxu0 %v326
        %1284 = vmatpush.msra.mxu0 %v324
        %1285 = vmatpush.msra.mxu0 %v322
        %1286 = vmatpush.msra.mxu0 %v320
        %1287 = vmatpush.msra.mxu0 %v318
        %1288 = vmatpush.msra.mxu0 %v316
        %1289 = vmatpush.msra.mxu0 %v314
        %1290 = vmatmul.f32.gmra.mxu0 %v1272
        %v1291 = vpop.f32.mrf.mxu0
        %v1292 = vadd.f32 0.0, %v1291
        %1293 = vdwg.mxu0
        %v1294 = vmul.f32 %v1292, 0.00390625
        %v1295 = vadd.f32 %v1294, 1e-05
        %v1296 = vrsqrt.pop %v1295
        %v1297 = vmul.f32 %v1296, %v1295
        %v1298 = vmul.f32 %v1297, %v1296
        %v1299 = vmul.f32 0.5, %v1298
        %v1300 = vsub.f32 1.5, %v1299
        %v1301 = vmul.f32 %v1296, %v1300
        %vm1302 = vweird.f32 %v1295
        %vm1303 = vweird.f32 %v1296
        %vm1304 = vmor %vm1302, %vm1303
        %v1305 = vsel %vm1304, %v1296, %v1301
        %v1307 = vrot.slane %v1305, 1
        %v1308 = vperm.slane %v1305, 0
        %v1309 = vperm.slane %v1307, 0
        %v1312 = vmul.f32 %v1248, %v1308
        %v1313 = vmul.f32 %v1249, %v1308
        %v1314 = vmul.f32 %v1250, %v1309
        %v1315 = vmul.f32 %v1251, %v1309
        %v1316 = vperm.slane %v312, 4
        %v1317 = vmul.f32 %v1312, %v1316
        %v1318 = vmul.f32 %v1313, %v1316
        %v1319 = vmul.f32 %v1314, %v1316
        %v1320 = vmul.f32 %v1315, %v1316
        %v1321 = vperm.slane %v312, 5
        %v1322 = vadd.f32 %v1317, %v1321
        %v1323 = vadd.f32 %v1318, %v1321
        %v1324 = vadd.f32 %v1319, %v1321
        %v1325 = vadd.f32 %v1320, %v1321
        %v1326 = vadd.f32 %v1322, %v1016
        %v1327 = vadd.f32 %v1323, %v1018
        %v1328 = vadd.f32 %v1324, %v1020
        %v1329 = vadd.f32 %v1325, %v1022
        %vm1330 = vcmp.gt.f32.partialorder %v1326, 0.0
        %vm1331 = vcmp.gt.f32.partialorder %v1327, 0.0
        %vm1332 = vcmp.gt.f32.partialorder %v1328, 0.0
        %vm1333 = vcmp.gt.f32.partialorder %v1329, 0.0
        %v1334 = vmul.f32 %v1326, 0.01
        %v1335 = vmul.f32 %v1327, 0.01
        %v1336 = vmul.f32 %v1328, 0.01
        %v1337 = vmul.f32 %v1329, 0.01
        %v1338 = vsel %vm1330, %v1326, %v1334
        %v1339 = vsel %vm1331, %v1327, %v1335
        %v1340 = vsel %vm1332, %v1328, %v1336
        %v1341 = vsel %vm1333, %v1329, %v1337
        %1342 = vst [vmem:[%s309] sm:$0xff] %v1338
        %1343 = vst [vmem:[%s309 + $0x8] sm:$0xff] %v1339
        %1344 = vst [vmem:[%s309 + $0x10] sm:$0xff] %v1340
        %1345 = vst [vmem:[%s309 + $0x18] sm:$0xff] %v1341
        %s1346 = sand.u32 %s142, 1
        %s1347 = scalar_lea.sflag [#allocation4], %s1346
        %s1348 = sand.u32 %s142, 1
        %s1349 = smul.addr %s1348, 32
        %s1350 = scalar_lea.vmem [#allocation11], %s1349
        // Predicated region
        $region61: #{tpu_custom_call.1} parent=39 // pred_check
          %p1351 = pneg %p152
        $region62: #{tpu_custom_call.1} parent=39 // pred_check_branch
          %1353 = sbr.rel (%p1351) target = $region64
        $region63: #{tpu_custom_call.1} parent=39 // pred_region
          %s1354 = smul.u32 2, %s24
          %1356 = vsyncadd %s1347, 0
          %s1357 = smul.addr %s1354, 2
          %s1358 = smul.addr %s1357, 8
          %s1359 = scalar_lea.hbm %s5, %s1358
          %s1360 = sshll.u32 %s1350, 4
          %s1361 = int_to_ptr.vmem [resolvable:$true] %s1360
          %s1362 = sshll.u32 %s1359, 4
          %s1363 = int_to_ptr.hbm [resolvable:$true] %s1362
          %1368 = dma.vmem_to_hbm [thread:$0]  %s1361, 512, %s1363, %s1347, 128, 128, 8
        $region64: #{tpu_custom_call.1} parent=39 // pred_fallthru
          _
      $region40: #{tpu_custom_call.1} parent=5 // pred_fallthru
        _
      %p1369 = scmp.le.s32.totalorder 2, %s19
      // Predicated region
      $region65: #{tpu_custom_call.1} parent=5 // pred_check
        %p1370 = pneg %p1369
      $region66: #{tpu_custom_call.1} parent=5 // pred_check_branch
        %1372 = sbr.rel (%p1370) target = $region68
      $region67: #{tpu_custom_call.1} parent=5 // pred_region
        %s1373 = ssub.s32 %s19, 2
        // Predicated region
        $region69: #{tpu_custom_call.1} parent=67 // pred_check
          %p1374 = pneg %p158
        $region70: #{tpu_custom_call.1} parent=67 // pred_check_branch
          %1376 = sbr.rel (%p1374) target = $region72
        $region71: #{tpu_custom_call.1} parent=67 // pred_region
          %s1377 = sand.u32 %s143, 1
          %s1378 = scalar_lea.sflag [#allocation4], %s1377
          %s1379 = sand.u32 %s143, 1
          %s1380 = smul.addr %s1379, 32
          %s1381 = scalar_lea.vmem [#allocation11], %s1380
          %1383 = dma.done %s1378, 512
        $region72: #{tpu_custom_call.1} parent=67 // pred_fallthru
          _
      $region68: #{tpu_custom_call.1} parent=5 // pred_fallthru
        _
    $region6: #{tpu_custom_call.1} parent=1 // loop_footer
      %s23 = sadd.s32 1, %s19
    $region7: #{tpu_custom_call.1} parent=1 // loop_footer_branch
      %18 = sbr.rel target = $region3
    $region8: #{tpu_custom_call.1} parent=1 // loop_exit
      _
    %1384 = vsyncpa [#allocation3], 1
    %s1385 = scalar_lea.sflag [#allocation3], 1
    %1386 = vsyncpa %s1385, 1
    %1387 = vsyncpa [#allocation6], 1
    %1388 = vsyncpa [#allocation9], 1
    %1389 = vsyncpa [#allocation4], 1
    %s1390 = scalar_lea.sflag [#allocation4], 1
    %1391 = vsyncpa %s1390, 1

</llo_original>
